<compile_context>
chip_gen: v5e
topology: v5e:2x2
jax: 0.10.0
libtpu: 0.0.40
codegen_flags: <defaults>
</compile_context>

<pallas_src>
import numpy as np
import jax
import jax.numpy as jnp
from jax import lax
from jax.experimental import pallas as pl
from jax.experimental.pallas import tpu as pltpu


def _make_basic_block_kernel(D, H, W, C):
    """Kernel factory; closes over static spatial sizes / tap offsets."""
    HW = H * W
    DHW = D * HW
    P = HW + W + 1  # max |flat tap offset| for a 3x3x3 stencil, stride 1, pad 1
    # Flat-index offset of tap (kd, kh, kw): neighbor of output position m is
    # m + (kd-1)*HW + (kh-1)*W + (kw-1) whenever that neighbor is in range;
    # out-of-range neighbors are zeroed by the boundary mask.
    offs = [(kd - 1) * HW + (kh - 1) * W + (kw - 1)
            for kd in range(3) for kh in range(3) for kw in range(3)]

    def kernel(x_ref, mask_ref, w1_ref, s1_ref, b1_ref,
               w2_ref, s2_ref, b2_ref, out_ref, xext_s, patch_s):
        """Fused conv1+bn1+relu+conv2+bn2+residual+relu for one batch element.

        x_ref   : (1, C, DHW)          channel-first flat input (lane-dense)
        mask_ref: (27, DHW)            {0,1} boundary mask per tap
        w1_ref  : (C, 27*C)            conv1 weights, flipped-GEMM layout
        s1/b1   : (C, 1)               folded BN1 scale / bias
        w2_ref  : (C, 27*C)            conv2 weights
        s2/b2   : (C, 1)               folded BN2 scale / bias
        out_ref : (1, C, DHW)          channel-first flat output
        xext_s  : (C, DHW + 2P) f32    lane-extended shifted-window slab
        patch_s : (27*C, DHW)   f32    im2col patch (taps on sublanes, spatial
                                       on lanes)
        """
        x_cf = x_ref[0].astype(jnp.float32)        # (C, DHW)
        mask = mask_ref[...]                       # (27, DHW)

        # Halo-only zeroing: clear just the 2*P halo lanes per grid step; the
        # interior is fully overwritten for each conv below.
        zeros_halo = jnp.zeros((C, P), jnp.float32)
        xext_s[:, 0:P] = zeros_halo
        xext_s[:, P + DHW:2 * P + DHW] = zeros_halo

        def build_patch(src):
            # src: (C, DHW) f32 value.  Each tap is a static contiguous
            # lane-window read at offset P + off_t (wrap/halo values are zero
            # or masked), stored to a sublane-aligned, 192-lane-wide row block
            # of the patch matrix.  Row order (kd, kh, kw, c) matches the
            # (3,3,3,C,Cout) -> (Cout, 27*C) weight reshape in the wrapper.
            xext_s[:, P:P + DHW] = src
            for t in range(27):
                if offs[t] == 0:                       # center tap: mask == 1
                    patch_s[t * C:(t + 1) * C, :] = src
                else:
                    start = P + offs[t]
                    patch_s[t * C:(t + 1) * C, :] = (
                        xext_s[:, start:start + DHW] * mask[t:t + 1, :])

        def conv_bn(w_ref, s_ref, b_ref):
            # One big-K (K = 27*C) matmul with spatial (DHW) on MXU lanes.
            y = jnp.dot(w_ref[...], patch_s[...],
                        preferred_element_type=jnp.float32)   # (C, DHW)
            return y * s_ref[...] + b_ref[...]                 # folded BN

        # conv1 + bn1 + relu -> h stays entirely on-chip (no HBM round trip).
        build_patch(x_cf)
        h = jnp.maximum(conv_bn(w1_ref, s1_ref, b1_ref), 0.0)

        # conv2 + bn2 + identity residual + relu (Cin == Cout).
        build_patch(h)
        y = conv_bn(w2_ref, s2_ref, b2_ref) + x_cf
        out_ref[0] = jnp.maximum(y, 0.0).astype(out_ref.dtype)

    return kernel


def _boundary_masks(D, H, W):
    """(27, D*H*W) {0,1} float32 masks: tap (kd,kh,kw) valid at flat pos m."""
    HW, DHW = H * W, D * H * W
    idx = np.arange(DHW)
    d, h, w = idx // HW, (idx // W) % H, idx % W
    rows = []
    for kd in range(3):
        for kh in range(3):
            for kw in range(3):
                dd, hh, ww = d + kd - 1, h + kh - 1, w + kw - 1
                rows.append((0 <= dd) & (dd < D) & (0 <= hh) & (hh < H)
                            & (0 <= ww) & (ww < W))
    return jnp.asarray(np.stack(rows).astype(np.float32))


def basic_block_forward(x, p):
    """BasicBlock forward (stride=1, downsample=None), NDHWC in / NDHWC out."""
    N, D, H, W, Cin = x.shape
    Cout = p["w1"].shape[-1]
    if Cin != Cout:
        raise ValueError("identity residual requires inplanes == planes "
                         "(stride=1, downsample=None)")
    C = Cin
    HW, DHW = H * W, D * H * W
    P = HW + W + 1

    # Channel-first flat activations; spatial (DHW) goes on lanes in-kernel.
    x_cf = jnp.transpose(x, (0, 4, 1, 2, 3)).reshape(N, C, DHW)
    # Flipped-GEMM weight layout; column order (kd,kh,kw,ci) matches the patch
    # row order built in-kernel.
    w1m = p["w1"].reshape(27 * C, C).T             # (Cout, 27*Cin)
    w2m = p["w2"].reshape(27 * C, C).T
    s1 = p["scale1"].reshape(C, 1)
    b1 = p["bias1"].reshape(C, 1)
    s2 = p["scale2"].reshape(C, 1)
    b2 = p["bias2"].reshape(C, 1)
    mask = _boundary_masks(D, H, W)                # (27, DHW)

    out_cf = pl.pallas_call(
        _make_basic_block_kernel(D, H, W, C),
        out_shape=jax.ShapeDtypeStruct((N, C, DHW), x.dtype),
        grid=(N,),
        in_specs=[
            pl.BlockSpec((1, C, DHW), lambda n: (n, 0, 0)),   # x_cf
            pl.BlockSpec((27, DHW), lambda n: (0, 0)),        # boundary masks
            pl.BlockSpec((C, 27 * C), lambda n: (0, 0)),      # w1
            pl.BlockSpec((C, 1), lambda n: (0, 0)),           # scale1
            pl.BlockSpec((C, 1), lambda n: (0, 0)),           # bias1
            pl.BlockSpec((C, 27 * C), lambda n: (0, 0)),      # w2
            pl.BlockSpec((C, 1), lambda n: (0, 0)),           # scale2
            pl.BlockSpec((C, 1), lambda n: (0, 0)),           # bias2
        ],
        out_specs=pl.BlockSpec((1, C, DHW), lambda n: (n, 0, 0)),
        scratch_shapes=[
            pltpu.VMEM((C, DHW + 2 * P), jnp.float32),        # extended slab
            pltpu.VMEM((27 * C, DHW), jnp.float32),           # im2col patches
        ],
        compiler_params=pltpu.CompilerParams(
            dimension_semantics=("parallel",)),
    )(x_cf, mask, w1m, s1, b1, w2m, s2, b2)

    # Lane-dense store in-kernel; NDHWC layout restored in the wrapper.
    return jnp.transpose(out_cf.reshape(N, C, D, H, W), (0, 2, 3, 4, 1))


def fold_bn(gamma, beta, mean, var, eps=1e-5):
    scale = gamma / jnp.sqrt(var + eps)
    bias = beta - mean * scale
    return scale, bias


def init_basic_block_params(key, inplanes, planes):
    k1, k2 = jax.random.split(key)
    w1 = jax.random.normal(k1, (3, 3, 3, inplanes, planes), jnp.float32) * 0.1
    w2 = jax.random.normal(k2, (3, 3, 3, planes, planes), jnp.float32) * 0.1
    # Deterministic (non-trivial) BatchNorm parameters / running stats.
    c = jnp.arange(planes, dtype=jnp.float32)
    g1, b1, m1, v1 = 1.0 + 0.10 * c, 0.05 * c, 0.01 * c, 1.0 + 0.02 * c
    g2, b2, m2, v2 = 1.0 - 0.05 * c, -0.03 * c, 0.02 * c, 1.0 + 0.01 * c
    s1, bb1 = fold_bn(g1, b1, m1, v1)
    s2, bb2 = fold_bn(g2, b2, m2, v2)
    return dict(w1=w1, scale1=s1, bias1=bb1, w2=w2, scale2=s2, bias2=bb2)


def basic_block_reference(x, p):
    """Pure-JAX reference using lax.conv_general_dilated (eval-mode BN folded)."""
    dn = lax.conv_dimension_numbers(x.shape, p["w1"].shape,
                                    ("NDHWC", "DHWIO", "NDHWC"))

    def conv(h, w):
        return lax.conv_general_dilated(
            h, w, window_strides=(1, 1, 1),
            padding=[(1, 1), (1, 1), (1, 1)], dimension_numbers=dn)

    h = jnp.maximum(conv(x, p["w1"]) * p["scale1"] + p["bias1"], 0.0)
    y = conv(h, p["w2"]) * p["scale2"] + p["bias2"] + x
    return jnp.maximum(y, 0.0)


if __name__ == "__main__":
    # Small shapes: batch=2, channels=8, spatial D=4, H=6, W=8 (NDHWC).
    N, D, H, W, C = 2, 4, 6, 8, 8
    key = jax.random.PRNGKey(0)
    kx, kp = jax.random.split(key)
    x = jax.random.normal(kx, (N, D, H, W, C), jnp.float32)
    params = init_basic_block_params(kp, inplanes=C, planes=C)

    out = basic_block_forward(x, params)
    out = jax.block_until_ready(out)

    ref = basic_block_reference(x, params)
    assert out.shape == (N, D, H, W, C)
    assert jnp.allclose(out, ref, atol=1e-4, rtol=1e-4), "mismatch vs JAX reference"
    print("KERNEL_OK")
</pallas_src>

<mosaic_0001>
module attributes {stable_mosaic.version = 11 : i64} {
  func.func @kernel(%arg0: i32, %arg1: memref<1x8x192xf32, #tpu.memory_space<vmem>>, %arg2: memref<27x192xf32, #tpu.memory_space<vmem>>, %arg3: memref<8x216xf32, #tpu.memory_space<vmem>>, %arg4: memref<8x1xf32, #tpu.memory_space<vmem>>, %arg5: memref<8x1xf32, #tpu.memory_space<vmem>>, %arg6: memref<8x216xf32, #tpu.memory_space<vmem>>, %arg7: memref<8x1xf32, #tpu.memory_space<vmem>>, %arg8: memref<8x1xf32, #tpu.memory_space<vmem>>, %arg9: memref<1x8x192xf32, #tpu.memory_space<vmem>>, %arg10: memref<8x306xf32, #tpu.memory_space<vmem>>, %arg11: memref<216x192xf32, #tpu.memory_space<vmem>>) attributes {dimension_semantics = [#tpu.dimension_semantics<parallel>], iteration_bounds = array<i64: 2>, scalar_prefetch = 0 : i64, scratch_operands = 2 : i64, tpu.core_type = #tpu.core_type<tc>, window_params = [{transform_indices = @transform_0, window_bounds = array<i64: 1, 8, 192>}, {pipeline_mode = #tpu.pipeline_mode<synchronous>, transform_indices = @transform_1, window_bounds = array<i64: 27, 192>}, {pipeline_mode = #tpu.pipeline_mode<synchronous>, transform_indices = @transform_2, window_bounds = array<i64: 8, 216>}, {pipeline_mode = #tpu.pipeline_mode<synchronous>, transform_indices = @transform_3, window_bounds = array<i64: 8, 1>}, {pipeline_mode = #tpu.pipeline_mode<synchronous>, transform_indices = @transform_4, window_bounds = array<i64: 8, 1>}, {pipeline_mode = #tpu.pipeline_mode<synchronous>, transform_indices = @transform_5, window_bounds = array<i64: 8, 216>}, {pipeline_mode = #tpu.pipeline_mode<synchronous>, transform_indices = @transform_6, window_bounds = array<i64: 8, 1>}, {pipeline_mode = #tpu.pipeline_mode<synchronous>, transform_indices = @transform_7, window_bounds = array<i64: 8, 1>}, {transform_indices = @transform_8, window_bounds = array<i64: 1, 8, 192>}]} {
    %c0 = arith.constant 0 : index
    %c0_0 = arith.constant 0 : index
    %c0_1 = arith.constant 0 : index
    %0 = vector.load %arg1[%c0, %c0_0, %c0_1] : memref<1x8x192xf32, #tpu.memory_space<vmem>>, vector<1x8x192xf32>
    %1 = vector.shape_cast %0 : vector<1x8x192xf32> to vector<8x192xf32>
    %c0_2 = arith.constant 0 : index
    %c0_3 = arith.constant 0 : index
    %2 = vector.load %arg2[%c0_2, %c0_3] : memref<27x192xf32, #tpu.memory_space<vmem>>, vector<27x192xf32>
    %cst = arith.constant 0.000000e+00 : f32
    %3 = vector.broadcast %cst : f32 to vector<8x57xf32>
    %c0_4 = arith.constant 0 : index
    %c0_5 = arith.constant 0 : index
    %4 = vector.load %arg10[%c0_4, %c0_5] : memref<8x306xf32, #tpu.memory_space<vmem>>, vector<8x57xf32>
    tpu.vector_store %arg10[%c0_4, %c0_5], %3 {strides = array<i32>} : memref<8x306xf32, #tpu.memory_space<vmem>>, vector<8x57xf32>,
    %c0_6 = arith.constant 0 : index
    %c249 = arith.constant 249 : index
    %5 = vector.load %arg10[%c0_6, %c249] : memref<8x306xf32, #tpu.memory_space<vmem>>, vector<8x57xf32>
    tpu.vector_store %arg10[%c0_6, %c249], %3 {strides = array<i32>} : memref<8x306xf32, #tpu.memory_space<vmem>>, vector<8x57xf32>,
    %c0_7 = arith.constant 0 : index
    %c57 = arith.constant 57 : index
    %6 = vector.load %arg10[%c0_7, %c57] : memref<8x306xf32, #tpu.memory_space<vmem>>, vector<8x192xf32>
    tpu.vector_store %arg10[%c0_7, %c57], %1 {strides = array<i32>} : memref<8x306xf32, #tpu.memory_space<vmem>>, vector<8x192xf32>,
    %c0_8 = arith.constant 0 : index
    %c0_9 = arith.constant 0 : index
    %7 = vector.load %arg10[%c0_8, %c0_9] : memref<8x306xf32, #tpu.memory_space<vmem>>, vector<8x192xf32>
    %8 = vector.extract_strided_slice %2 {offsets = [0, 0], sizes = [1, 192], strides = [1, 1]} : vector<27x192xf32> to vector<1x192xf32>
    %9 = vector.broadcast %8 : vector<1x192xf32> to vector<8x192xf32>
    %10 = arith.mulf %7, %9 : vector<8x192xf32>
    %c0_10 = arith.constant 0 : index
    %c0_11 = arith.constant 0 : index
    %11 = vector.load %arg11[%c0_10, %c0_11] : memref<216x192xf32, #tpu.memory_space<vmem>>, vector<8x192xf32>
    tpu.vector_store %arg11[%c0_10, %c0_11], %10 {strides = array<i32>} : memref<216x192xf32, #tpu.memory_space<vmem>>, vector<8x192xf32>,
    %c0_12 = arith.constant 0 : index
    %c1 = arith.constant 1 : index
    %12 = vector.load %arg10[%c0_12, %c1] : memref<8x306xf32, #tpu.memory_space<vmem>>, vector<8x192xf32>
    %13 = vector.extract_strided_slice %2 {offsets = [1, 0], sizes = [1, 192], strides = [1, 1]} : vector<27x192xf32> to vector<1x192xf32>
    %14 = vector.broadcast %13 : vector<1x192xf32> to vector<8x192xf32>
    %15 = arith.mulf %12, %14 : vector<8x192xf32>
    %c8 = arith.constant 8 : index
    %c0_13 = arith.constant 0 : index
    %16 = vector.load %arg11[%c8, %c0_13] : memref<216x192xf32, #tpu.memory_space<vmem>>, vector<8x192xf32>
    tpu.vector_store %arg11[%c8, %c0_13], %15 {strides = array<i32>} : memref<216x192xf32, #tpu.memory_space<vmem>>, vector<8x192xf32>,
    %c0_14 = arith.constant 0 : index
    %c2 = arith.constant 2 : index
    %17 = vector.load %arg10[%c0_14, %c2] : memref<8x306xf32, #tpu.memory_space<vmem>>, vector<8x192xf32>
    %18 = vector.extract_strided_slice %2 {offsets = [2, 0], sizes = [1, 192], strides = [1, 1]} : vector<27x192xf32> to vector<1x192xf32>
    %19 = vector.broadcast %18 : vector<1x192xf32> to vector<8x192xf32>
    %20 = arith.mulf %17, %19 : vector<8x192xf32>
    %c16 = arith.constant 16 : index
    %c0_15 = arith.constant 0 : index
    %21 = vector.load %arg11[%c16, %c0_15] : memref<216x192xf32, #tpu.memory_space<vmem>>, vector<8x192xf32>
    tpu.vector_store %arg11[%c16, %c0_15], %20 {strides = array<i32>} : memref<216x192xf32, #tpu.memory_space<vmem>>, vector<8x192xf32>,
    %c0_16 = arith.constant 0 : index
    %c8_17 = arith.constant 8 : index
    %22 = vector.load %arg10[%c0_16, %c8_17] : memref<8x306xf32, #tpu.memory_space<vmem>>, vector<8x192xf32>
    %23 = vector.extract_strided_slice %2 {offsets = [3, 0], sizes = [1, 192], strides = [1, 1]} : vector<27x192xf32> to vector<1x192xf32>
    %24 = vector.broadcast %23 : vector<1x192xf32> to vector<8x192xf32>
    %25 = arith.mulf %22, %24 : vector<8x192xf32>
    %c24 = arith.constant 24 : index
    %c0_18 = arith.constant 0 : index
    %26 = vector.load %arg11[%c24, %c0_18] : memref<216x192xf32, #tpu.memory_space<vmem>>, vector<8x192xf32>
    tpu.vector_store %arg11[%c24, %c0_18], %25 {strides = array<i32>} : memref<216x192xf32, #tpu.memory_space<vmem>>, vector<8x192xf32>,
    %c0_19 = arith.constant 0 : index
    %c9 = arith.constant 9 : index
    %27 = vector.load %arg10[%c0_19, %c9] : memref<8x306xf32, #tpu.memory_space<vmem>>, vector<8x192xf32>
    %28 = vector.extract_strided_slice %2 {offsets = [4, 0], sizes = [1, 192], strides = [1, 1]} : vector<27x192xf32> to vector<1x192xf32>
    %29 = vector.broadcast %28 : vector<1x192xf32> to vector<8x192xf32>
    %30 = arith.mulf %27, %29 : vector<8x192xf32>
    %c32 = arith.constant 32 : index
    %c0_20 = arith.constant 0 : index
    %31 = vector.load %arg11[%c32, %c0_20] : memref<216x192xf32, #tpu.memory_space<vmem>>, vector<8x192xf32>
    tpu.vector_store %arg11[%c32, %c0_20], %30 {strides = array<i32>} : memref<216x192xf32, #tpu.memory_space<vmem>>, vector<8x192xf32>,
    %c0_21 = arith.constant 0 : index
    %c10 = arith.constant 10 : index
    %32 = vector.load %arg10[%c0_21, %c10] : memref<8x306xf32, #tpu.memory_space<vmem>>, vector<8x192xf32>
    %33 = vector.extract_strided_slice %2 {offsets = [5, 0], sizes = [1, 192], strides = [1, 1]} : vector<27x192xf32> to vector<1x192xf32>
    %34 = vector.broadcast %33 : vector<1x192xf32> to vector<8x192xf32>
    %35 = arith.mulf %32, %34 : vector<8x192xf32>
    %c40 = arith.constant 40 : index
    %c0_22 = arith.constant 0 : index
    %36 = vector.load %arg11[%c40, %c0_22] : memref<216x192xf32, #tpu.memory_space<vmem>>, vector<8x192xf32>
    tpu.vector_store %arg11[%c40, %c0_22], %35 {strides = array<i32>} : memref<216x192xf32, #tpu.memory_space<vmem>>, vector<8x192xf32>,
    %c0_23 = arith.constant 0 : index
    %c16_24 = arith.constant 16 : index
    %37 = vector.load %arg10[%c0_23, %c16_24] : memref<8x306xf32, #tpu.memory_space<vmem>>, vector<8x192xf32>
    %38 = vector.extract_strided_slice %2 {offsets = [6, 0], sizes = [1, 192], strides = [1, 1]} : vector<27x192xf32> to vector<1x192xf32>
    %39 = vector.broadcast %38 : vector<1x192xf32> to vector<8x192xf32>
    %40 = arith.mulf %37, %39 : vector<8x192xf32>
    %c48 = arith.constant 48 : index
    %c0_25 = arith.constant 0 : index
    %41 = vector.load %arg11[%c48, %c0_25] : memref<216x192xf32, #tpu.memory_space<vmem>>, vector<8x192xf32>
    tpu.vector_store %arg11[%c48, %c0_25], %40 {strides = array<i32>} : memref<216x192xf32, #tpu.memory_space<vmem>>, vector<8x192xf32>,
    %c0_26 = arith.constant 0 : index
    %c17 = arith.constant 17 : index
    %42 = vector.load %arg10[%c0_26, %c17] : memref<8x306xf32, #tpu.memory_space<vmem>>, vector<8x192xf32>
    %43 = vector.extract_strided_slice %2 {offsets = [7, 0], sizes = [1, 192], strides = [1, 1]} : vector<27x192xf32> to vector<1x192xf32>
    %44 = vector.broadcast %43 : vector<1x192xf32> to vector<8x192xf32>
    %45 = arith.mulf %42, %44 : vector<8x192xf32>
    %c56 = arith.constant 56 : index
    %c0_27 = arith.constant 0 : index
    %46 = vector.load %arg11[%c56, %c0_27] : memref<216x192xf32, #tpu.memory_space<vmem>>, vector<8x192xf32>
    tpu.vector_store %arg11[%c56, %c0_27], %45 {strides = array<i32>} : memref<216x192xf32, #tpu.memory_space<vmem>>, vector<8x192xf32>,
    %c0_28 = arith.constant 0 : index
    %c18 = arith.constant 18 : index
    %47 = vector.load %arg10[%c0_28, %c18] : memref<8x306xf32, #tpu.memory_space<vmem>>, vector<8x192xf32>
    %48 = vector.extract_strided_slice %2 {offsets = [8, 0], sizes = [1, 192], strides = [1, 1]} : vector<27x192xf32> to vector<1x192xf32>
    %49 = vector.broadcast %48 : vector<1x192xf32> to vector<8x192xf32>
    %50 = arith.mulf %47, %49 : vector<8x192xf32>
    %c64 = arith.constant 64 : index
    %c0_29 = arith.constant 0 : index
    %51 = vector.load %arg11[%c64, %c0_29] : memref<216x192xf32, #tpu.memory_space<vmem>>, vector<8x192xf32>
    tpu.vector_store %arg11[%c64, %c0_29], %50 {strides = array<i32>} : memref<216x192xf32, #tpu.memory_space<vmem>>, vector<8x192xf32>,
    %c0_30 = arith.constant 0 : index
    %c48_31 = arith.constant 48 : index
    %52 = vector.load %arg10[%c0_30, %c48_31] : memref<8x306xf32, #tpu.memory_space<vmem>>, vector<8x192xf32>
    %53 = vector.extract_strided_slice %2 {offsets = [9, 0], sizes = [1, 192], strides = [1, 1]} : vector<27x192xf32> to vector<1x192xf32>
    %54 = vector.broadcast %53 : vector<1x192xf32> to vector<8x192xf32>
    %55 = arith.mulf %52, %54 : vector<8x192xf32>
    %c72 = arith.constant 72 : index
    %c0_32 = arith.constant 0 : index
    %56 = vector.load %arg11[%c72, %c0_32] : memref<216x192xf32, #tpu.memory_space<vmem>>, vector<8x192xf32>
    tpu.vector_store %arg11[%c72, %c0_32], %55 {strides = array<i32>} : memref<216x192xf32, #tpu.memory_space<vmem>>, vector<8x192xf32>,
    %c0_33 = arith.constant 0 : index
    %c49 = arith.constant 49 : index
    %57 = vector.load %arg10[%c0_33, %c49] : memref<8x306xf32, #tpu.memory_space<vmem>>, vector<8x192xf32>
    %58 = vector.extract_strided_slice %2 {offsets = [10, 0], sizes = [1, 192], strides = [1, 1]} : vector<27x192xf32> to vector<1x192xf32>
    %59 = vector.broadcast %58 : vector<1x192xf32> to vector<8x192xf32>
    %60 = arith.mulf %57, %59 : vector<8x192xf32>
    %c80 = arith.constant 80 : index
    %c0_34 = arith.constant 0 : index
    %61 = vector.load %arg11[%c80, %c0_34] : memref<216x192xf32, #tpu.memory_space<vmem>>, vector<8x192xf32>
    tpu.vector_store %arg11[%c80, %c0_34], %60 {strides = array<i32>} : memref<216x192xf32, #tpu.memory_space<vmem>>, vector<8x192xf32>,
    %c0_35 = arith.constant 0 : index
    %c50 = arith.constant 50 : index
    %62 = vector.load %arg10[%c0_35, %c50] : memref<8x306xf32, #tpu.memory_space<vmem>>, vector<8x192xf32>
    %63 = vector.extract_strided_slice %2 {offsets = [11, 0], sizes = [1, 192], strides = [1, 1]} : vector<27x192xf32> to vector<1x192xf32>
    %64 = vector.broadcast %63 : vector<1x192xf32> to vector<8x192xf32>
    %65 = arith.mulf %62, %64 : vector<8x192xf32>
    %c88 = arith.constant 88 : index
    %c0_36 = arith.constant 0 : index
    %66 = vector.load %arg11[%c88, %c0_36] : memref<216x192xf32, #tpu.memory_space<vmem>>, vector<8x192xf32>
    tpu.vector_store %arg11[%c88, %c0_36], %65 {strides = array<i32>} : memref<216x192xf32, #tpu.memory_space<vmem>>, vector<8x192xf32>,
    %c0_37 = arith.constant 0 : index
    %c56_38 = arith.constant 56 : index
    %67 = vector.load %arg10[%c0_37, %c56_38] : memref<8x306xf32, #tpu.memory_space<vmem>>, vector<8x192xf32>
    %68 = vector.extract_strided_slice %2 {offsets = [12, 0], sizes = [1, 192], strides = [1, 1]} : vector<27x192xf32> to vector<1x192xf32>
    %69 = vector.broadcast %68 : vector<1x192xf32> to vector<8x192xf32>
    %70 = arith.mulf %67, %69 : vector<8x192xf32>
    %c96 = arith.constant 96 : index
    %c0_39 = arith.constant 0 : index
    %71 = vector.load %arg11[%c96, %c0_39] : memref<216x192xf32, #tpu.memory_space<vmem>>, vector<8x192xf32>
    tpu.vector_store %arg11[%c96, %c0_39], %70 {strides = array<i32>} : memref<216x192xf32, #tpu.memory_space<vmem>>, vector<8x192xf32>,
    %c104 = arith.constant 104 : index
    %c0_40 = arith.constant 0 : index
    %72 = vector.load %arg11[%c104, %c0_40] : memref<216x192xf32, #tpu.memory_space<vmem>>, vector<8x192xf32>
    tpu.vector_store %arg11[%c104, %c0_40], %1 {strides = array<i32>} : memref<216x192xf32, #tpu.memory_space<vmem>>, vector<8x192xf32>,
    %c0_41 = arith.constant 0 : index
    %c58 = arith.constant 58 : index
    %73 = vector.load %arg10[%c0_41, %c58] : memref<8x306xf32, #tpu.memory_space<vmem>>, vector<8x192xf32>
    %74 = vector.extract_strided_slice %2 {offsets = [14, 0], sizes = [1, 192], strides = [1, 1]} : vector<27x192xf32> to vector<1x192xf32>
    %75 = vector.broadcast %74 : vector<1x192xf32> to vector<8x192xf32>
    %76 = arith.mulf %73, %75 : vector<8x192xf32>
    %c112 = arith.constant 112 : index
    %c0_42 = arith.constant 0 : index
    %77 = vector.load %arg11[%c112, %c0_42] : memref<216x192xf32, #tpu.memory_space<vmem>>, vector<8x192xf32>
    tpu.vector_store %arg11[%c112, %c0_42], %76 {strides = array<i32>} : memref<216x192xf32, #tpu.memory_space<vmem>>, vector<8x192xf32>,
    %c0_43 = arith.constant 0 : index
    %c64_44 = arith.constant 64 : index
    %78 = vector.load %arg10[%c0_43, %c64_44] : memref<8x306xf32, #tpu.memory_space<vmem>>, vector<8x192xf32>
    %79 = vector.extract_strided_slice %2 {offsets = [15, 0], sizes = [1, 192], strides = [1, 1]} : vector<27x192xf32> to vector<1x192xf32>
    %80 = vector.broadcast %79 : vector<1x192xf32> to vector<8x192xf32>
    %81 = arith.mulf %78, %80 : vector<8x192xf32>
    %c120 = arith.constant 120 : index
    %c0_45 = arith.constant 0 : index
    %82 = vector.load %arg11[%c120, %c0_45] : memref<216x192xf32, #tpu.memory_space<vmem>>, vector<8x192xf32>
    tpu.vector_store %arg11[%c120, %c0_45], %81 {strides = array<i32>} : memref<216x192xf32, #tpu.memory_space<vmem>>, vector<8x192xf32>,
    %c0_46 = arith.constant 0 : index
    %c65 = arith.constant 65 : index
    %83 = vector.load %arg10[%c0_46, %c65] : memref<8x306xf32, #tpu.memory_space<vmem>>, vector<8x192xf32>
    %84 = vector.extract_strided_slice %2 {offsets = [16, 0], sizes = [1, 192], strides = [1, 1]} : vector<27x192xf32> to vector<1x192xf32>
    %85 = vector.broadcast %84 : vector<1x192xf32> to vector<8x192xf32>
    %86 = arith.mulf %83, %85 : vector<8x192xf32>
    %c128 = arith.constant 128 : index
    %c0_47 = arith.constant 0 : index
    %87 = vector.load %arg11[%c128, %c0_47] : memref<216x192xf32, #tpu.memory_space<vmem>>, vector<8x192xf32>
    tpu.vector_store %arg11[%c128, %c0_47], %86 {strides = array<i32>} : memref<216x192xf32, #tpu.memory_space<vmem>>, vector<8x192xf32>,
    %c0_48 = arith.constant 0 : index
    %c66 = arith.constant 66 : index
    %88 = vector.load %arg10[%c0_48, %c66] : memref<8x306xf32, #tpu.memory_space<vmem>>, vector<8x192xf32>
    %89 = vector.extract_strided_slice %2 {offsets = [17, 0], sizes = [1, 192], strides = [1, 1]} : vector<27x192xf32> to vector<1x192xf32>
    %90 = vector.broadcast %89 : vector<1x192xf32> to vector<8x192xf32>
    %91 = arith.mulf %88, %90 : vector<8x192xf32>
    %c136 = arith.constant 136 : index
    %c0_49 = arith.constant 0 : index
    %92 = vector.load %arg11[%c136, %c0_49] : memref<216x192xf32, #tpu.memory_space<vmem>>, vector<8x192xf32>
    tpu.vector_store %arg11[%c136, %c0_49], %91 {strides = array<i32>} : memref<216x192xf32, #tpu.memory_space<vmem>>, vector<8x192xf32>,
    %c0_50 = arith.constant 0 : index
    %c96_51 = arith.constant 96 : index
    %93 = vector.load %arg10[%c0_50, %c96_51] : memref<8x306xf32, #tpu.memory_space<vmem>>, vector<8x192xf32>
    %94 = vector.extract_strided_slice %2 {offsets = [18, 0], sizes = [1, 192], strides = [1, 1]} : vector<27x192xf32> to vector<1x192xf32>
    %95 = vector.broadcast %94 : vector<1x192xf32> to vector<8x192xf32>
    %96 = arith.mulf %93, %95 : vector<8x192xf32>
    %c144 = arith.constant 144 : index
    %c0_52 = arith.constant 0 : index
    %97 = vector.load %arg11[%c144, %c0_52] : memref<216x192xf32, #tpu.memory_space<vmem>>, vector<8x192xf32>
    tpu.vector_store %arg11[%c144, %c0_52], %96 {strides = array<i32>} : memref<216x192xf32, #tpu.memory_space<vmem>>, vector<8x192xf32>,
    %c0_53 = arith.constant 0 : index
    %c97 = arith.constant 97 : index
    %98 = vector.load %arg10[%c0_53, %c97] : memref<8x306xf32, #tpu.memory_space<vmem>>, vector<8x192xf32>
    %99 = vector.extract_strided_slice %2 {offsets = [19, 0], sizes = [1, 192], strides = [1, 1]} : vector<27x192xf32> to vector<1x192xf32>
    %100 = vector.broadcast %99 : vector<1x192xf32> to vector<8x192xf32>
    %101 = arith.mulf %98, %100 : vector<8x192xf32>
    %c152 = arith.constant 152 : index
    %c0_54 = arith.constant 0 : index
    %102 = vector.load %arg11[%c152, %c0_54] : memref<216x192xf32, #tpu.memory_space<vmem>>, vector<8x192xf32>
    tpu.vector_store %arg11[%c152, %c0_54], %101 {strides = array<i32>} : memref<216x192xf32, #tpu.memory_space<vmem>>, vector<8x192xf32>,
    %c0_55 = arith.constant 0 : index
    %c98 = arith.constant 98 : index
    %103 = vector.load %arg10[%c0_55, %c98] : memref<8x306xf32, #tpu.memory_space<vmem>>, vector<8x192xf32>
    %104 = vector.extract_strided_slice %2 {offsets = [20, 0], sizes = [1, 192], strides = [1, 1]} : vector<27x192xf32> to vector<1x192xf32>
    %105 = vector.broadcast %104 : vector<1x192xf32> to vector<8x192xf32>
    %106 = arith.mulf %103, %105 : vector<8x192xf32>
    %c160 = arith.constant 160 : index
    %c0_56 = arith.constant 0 : index
    %107 = vector.load %arg11[%c160, %c0_56] : memref<216x192xf32, #tpu.memory_space<vmem>>, vector<8x192xf32>
    tpu.vector_store %arg11[%c160, %c0_56], %106 {strides = array<i32>} : memref<216x192xf32, #tpu.memory_space<vmem>>, vector<8x192xf32>,
    %c0_57 = arith.constant 0 : index
    %c104_58 = arith.constant 104 : index
    %108 = vector.load %arg10[%c0_57, %c104_58] : memref<8x306xf32, #tpu.memory_space<vmem>>, vector<8x192xf32>
    %109 = vector.extract_strided_slice %2 {offsets = [21, 0], sizes = [1, 192], strides = [1, 1]} : vector<27x192xf32> to vector<1x192xf32>
    %110 = vector.broadcast %109 : vector<1x192xf32> to vector<8x192xf32>
    %111 = arith.mulf %108, %110 : vector<8x192xf32>
    %c168 = arith.constant 168 : index
    %c0_59 = arith.constant 0 : index
    %112 = vector.load %arg11[%c168, %c0_59] : memref<216x192xf32, #tpu.memory_space<vmem>>, vector<8x192xf32>
    tpu.vector_store %arg11[%c168, %c0_59], %111 {strides = array<i32>} : memref<216x192xf32, #tpu.memory_space<vmem>>, vector<8x192xf32>,
    %c0_60 = arith.constant 0 : index
    %c105 = arith.constant 105 : index
    %113 = vector.load %arg10[%c0_60, %c105] : memref<8x306xf32, #tpu.memory_space<vmem>>, vector<8x192xf32>
    %114 = vector.extract_strided_slice %2 {offsets = [22, 0], sizes = [1, 192], strides = [1, 1]} : vector<27x192xf32> to vector<1x192xf32>
    %115 = vector.broadcast %114 : vector<1x192xf32> to vector<8x192xf32>
    %116 = arith.mulf %113, %115 : vector<8x192xf32>
    %c176 = arith.constant 176 : index
    %c0_61 = arith.constant 0 : index
    %117 = vector.load %arg11[%c176, %c0_61] : memref<216x192xf32, #tpu.memory_space<vmem>>, vector<8x192xf32>
    tpu.vector_store %arg11[%c176, %c0_61], %116 {strides = array<i32>} : memref<216x192xf32, #tpu.memory_space<vmem>>, vector<8x192xf32>,
    %c0_62 = arith.constant 0 : index
    %c106 = arith.constant 106 : index
    %118 = vector.load %arg10[%c0_62, %c106] : memref<8x306xf32, #tpu.memory_space<vmem>>, vector<8x192xf32>
    %119 = vector.extract_strided_slice %2 {offsets = [23, 0], sizes = [1, 192], strides = [1, 1]} : vector<27x192xf32> to vector<1x192xf32>
    %120 = vector.broadcast %119 : vector<1x192xf32> to vector<8x192xf32>
    %121 = arith.mulf %118, %120 : vector<8x192xf32>
    %c184 = arith.constant 184 : index
    %c0_63 = arith.constant 0 : index
    %122 = vector.load %arg11[%c184, %c0_63] : memref<216x192xf32, #tpu.memory_space<vmem>>, vector<8x192xf32>
    tpu.vector_store %arg11[%c184, %c0_63], %121 {strides = array<i32>} : memref<216x192xf32, #tpu.memory_space<vmem>>, vector<8x192xf32>,
    %c0_64 = arith.constant 0 : index
    %c112_65 = arith.constant 112 : index
    %123 = vector.load %arg10[%c0_64, %c112_65] : memref<8x306xf32, #tpu.memory_space<vmem>>, vector<8x192xf32>
    %124 = vector.extract_strided_slice %2 {offsets = [24, 0], sizes = [1, 192], strides = [1, 1]} : vector<27x192xf32> to vector<1x192xf32>
    %125 = vector.broadcast %124 : vector<1x192xf32> to vector<8x192xf32>
    %126 = arith.mulf %123, %125 : vector<8x192xf32>
    %c192 = arith.constant 192 : index
    %c0_66 = arith.constant 0 : index
    %127 = vector.load %arg11[%c192, %c0_66] : memref<216x192xf32, #tpu.memory_space<vmem>>, vector<8x192xf32>
    tpu.vector_store %arg11[%c192, %c0_66], %126 {strides = array<i32>} : memref<216x192xf32, #tpu.memory_space<vmem>>, vector<8x192xf32>,
    %c0_67 = arith.constant 0 : index
    %c113 = arith.constant 113 : index
    %128 = vector.load %arg10[%c0_67, %c113] : memref<8x306xf32, #tpu.memory_space<vmem>>, vector<8x192xf32>
    %129 = vector.extract_strided_slice %2 {offsets = [25, 0], sizes = [1, 192], strides = [1, 1]} : vector<27x192xf32> to vector<1x192xf32>
    %130 = vector.broadcast %129 : vector<1x192xf32> to vector<8x192xf32>
    %131 = arith.mulf %128, %130 : vector<8x192xf32>
    %c200 = arith.constant 200 : index
    %c0_68 = arith.constant 0 : index
    %132 = vector.load %arg11[%c200, %c0_68] : memref<216x192xf32, #tpu.memory_space<vmem>>, vector<8x192xf32>
    tpu.vector_store %arg11[%c200, %c0_68], %131 {strides = array<i32>} : memref<216x192xf32, #tpu.memory_space<vmem>>, vector<8x192xf32>,
    %c0_69 = arith.constant 0 : index
    %c114 = arith.constant 114 : index
    %133 = vector.load %arg10[%c0_69, %c114] : memref<8x306xf32, #tpu.memory_space<vmem>>, vector<8x192xf32>
    %134 = vector.extract_strided_slice %2 {offsets = [26, 0], sizes = [1, 192], strides = [1, 1]} : vector<27x192xf32> to vector<1x192xf32>
    %135 = vector.broadcast %134 : vector<1x192xf32> to vector<8x192xf32>
    %136 = arith.mulf %133, %135 : vector<8x192xf32>
    %c208 = arith.constant 208 : index
    %c0_70 = arith.constant 0 : index
    %137 = vector.load %arg11[%c208, %c0_70] : memref<216x192xf32, #tpu.memory_space<vmem>>, vector<8x192xf32>
    tpu.vector_store %arg11[%c208, %c0_70], %136 {strides = array<i32>} : memref<216x192xf32, #tpu.memory_space<vmem>>, vector<8x192xf32>,
    %c0_71 = arith.constant 0 : index
    %c0_72 = arith.constant 0 : index
    %138 = vector.load %arg3[%c0_71, %c0_72] : memref<8x216xf32, #tpu.memory_space<vmem>>, vector<8x216xf32>
    %c0_73 = arith.constant 0 : index
    %c0_74 = arith.constant 0 : index
    %139 = vector.load %arg11[%c0_73, %c0_74] : memref<216x192xf32, #tpu.memory_space<vmem>>, vector<216x192xf32>
    %cst_75 = arith.constant dense<0.000000e+00> : vector<8x192xf32>
    %140 = tpu.matmul %138, %139, %cst_75 {dimension_numbers = #tpu.dot_dimension_numbers<[1], [0], [0], [1], [0, 0, 1, 1], [], []>} : vector<8x216xf32>, vector<216x192xf32>, vector<8x192xf32> -> vector<8x192xf32>
    %c0_76 = arith.constant 0 : index
    %c0_77 = arith.constant 0 : index
    %141 = vector.load %arg4[%c0_76, %c0_77] : memref<8x1xf32, #tpu.memory_space<vmem>>, vector<8x1xf32>
    %142 = vector.broadcast %141 : vector<8x1xf32> to vector<8x192xf32>
    %143 = arith.mulf %140, %142 : vector<8x192xf32>
    %c0_78 = arith.constant 0 : index
    %c0_79 = arith.constant 0 : index
    %144 = vector.load %arg5[%c0_78, %c0_79] : memref<8x1xf32, #tpu.memory_space<vmem>>, vector<8x1xf32>
    %145 = vector.broadcast %144 : vector<8x1xf32> to vector<8x192xf32>
    %146 = arith.addf %143, %145 : vector<8x192xf32>
    %cst_80 = arith.constant 0.000000e+00 : f32
    %147 = vector.broadcast %cst_80 : f32 to vector<8x192xf32>
    %148 = arith.maximumf %146, %147 : vector<8x192xf32>
    %c0_81 = arith.constant 0 : index
    %c57_82 = arith.constant 57 : index
    %149 = vector.load %arg10[%c0_81, %c57_82] : memref<8x306xf32, #tpu.memory_space<vmem>>, vector<8x192xf32>
    tpu.vector_store %arg10[%c0_81, %c57_82], %148 {strides = array<i32>} : memref<8x306xf32, #tpu.memory_space<vmem>>, vector<8x192xf32>,
    %c0_83 = arith.constant 0 : index
    %c0_84 = arith.constant 0 : index
    %150 = vector.load %arg10[%c0_83, %c0_84] : memref<8x306xf32, #tpu.memory_space<vmem>>, vector<8x192xf32>
    %151 = vector.extract_strided_slice %2 {offsets = [0, 0], sizes = [1, 192], strides = [1, 1]} : vector<27x192xf32> to vector<1x192xf32>
    %152 = vector.broadcast %151 : vector<1x192xf32> to vector<8x192xf32>
    %153 = arith.mulf %150, %152 : vector<8x192xf32>
    %c0_85 = arith.constant 0 : index
    %c0_86 = arith.constant 0 : index
    %154 = vector.load %arg11[%c0_85, %c0_86] : memref<216x192xf32, #tpu.memory_space<vmem>>, vector<8x192xf32>
    tpu.vector_store %arg11[%c0_85, %c0_86], %153 {strides = array<i32>} : memref<216x192xf32, #tpu.memory_space<vmem>>, vector<8x192xf32>,
    %c0_87 = arith.constant 0 : index
    %c1_88 = arith.constant 1 : index
    %155 = vector.load %arg10[%c0_87, %c1_88] : memref<8x306xf32, #tpu.memory_space<vmem>>, vector<8x192xf32>
    %156 = vector.extract_strided_slice %2 {offsets = [1, 0], sizes = [1, 192], strides = [1, 1]} : vector<27x192xf32> to vector<1x192xf32>
    %157 = vector.broadcast %156 : vector<1x192xf32> to vector<8x192xf32>
    %158 = arith.mulf %155, %157 : vector<8x192xf32>
    %c8_89 = arith.constant 8 : index
    %c0_90 = arith.constant 0 : index
    %159 = vector.load %arg11[%c8_89, %c0_90] : memref<216x192xf32, #tpu.memory_space<vmem>>, vector<8x192xf32>
    tpu.vector_store %arg11[%c8_89, %c0_90], %158 {strides = array<i32>} : memref<216x192xf32, #tpu.memory_space<vmem>>, vector<8x192xf32>,
    %c0_91 = arith.constant 0 : index
    %c2_92 = arith.constant 2 : index
    %160 = vector.load %arg10[%c0_91, %c2_92] : memref<8x306xf32, #tpu.memory_space<vmem>>, vector<8x192xf32>
    %161 = vector.extract_strided_slice %2 {offsets = [2, 0], sizes = [1, 192], strides = [1, 1]} : vector<27x192xf32> to vector<1x192xf32>
    %162 = vector.broadcast %161 : vector<1x192xf32> to vector<8x192xf32>
    %163 = arith.mulf %160, %162 : vector<8x192xf32>
    %c16_93 = arith.constant 16 : index
    %c0_94 = arith.constant 0 : index
    %164 = vector.load %arg11[%c16_93, %c0_94] : memref<216x192xf32, #tpu.memory_space<vmem>>, vector<8x192xf32>
    tpu.vector_store %arg11[%c16_93, %c0_94], %163 {strides = array<i32>} : memref<216x192xf32, #tpu.memory_space<vmem>>, vector<8x192xf32>,
    %c0_95 = arith.constant 0 : index
    %c8_96 = arith.constant 8 : index
    %165 = vector.load %arg10[%c0_95, %c8_96] : memref<8x306xf32, #tpu.memory_space<vmem>>, vector<8x192xf32>
    %166 = vector.extract_strided_slice %2 {offsets = [3, 0], sizes = [1, 192], strides = [1, 1]} : vector<27x192xf32> to vector<1x192xf32>
    %167 = vector.broadcast %166 : vector<1x192xf32> to vector<8x192xf32>
    %168 = arith.mulf %165, %167 : vector<8x192xf32>
    %c24_97 = arith.constant 24 : index
    %c0_98 = arith.constant 0 : index
    %169 = vector.load %arg11[%c24_97, %c0_98] : memref<216x192xf32, #tpu.memory_space<vmem>>, vector<8x192xf32>
    tpu.vector_store %arg11[%c24_97, %c0_98], %168 {strides = array<i32>} : memref<216x192xf32, #tpu.memory_space<vmem>>, vector<8x192xf32>,
    %c0_99 = arith.constant 0 : index
    %c9_100 = arith.constant 9 : index
    %170 = vector.load %arg10[%c0_99, %c9_100] : memref<8x306xf32, #tpu.memory_space<vmem>>, vector<8x192xf32>
    %171 = vector.extract_strided_slice %2 {offsets = [4, 0], sizes = [1, 192], strides = [1, 1]} : vector<27x192xf32> to vector<1x192xf32>
    %172 = vector.broadcast %171 : vector<1x192xf32> to vector<8x192xf32>
    %173 = arith.mulf %170, %172 : vector<8x192xf32>
    %c32_101 = arith.constant 32 : index
    %c0_102 = arith.constant 0 : index
    %174 = vector.load %arg11[%c32_101, %c0_102] : memref<216x192xf32, #tpu.memory_space<vmem>>, vector<8x192xf32>
    tpu.vector_store %arg11[%c32_101, %c0_102], %173 {strides = array<i32>} : memref<216x192xf32, #tpu.memory_space<vmem>>, vector<8x192xf32>,
    %c0_103 = arith.constant 0 : index
    %c10_104 = arith.constant 10 : index
    %175 = vector.load %arg10[%c0_103, %c10_104] : memref<8x306xf32, #tpu.memory_space<vmem>>, vector<8x192xf32>
    %176 = vector.extract_strided_slice %2 {offsets = [5, 0], sizes = [1, 192], strides = [1, 1]} : vector<27x192xf32> to vector<1x192xf32>
    %177 = vector.broadcast %176 : vector<1x192xf32> to vector<8x192xf32>
    %178 = arith.mulf %175, %177 : vector<8x192xf32>
    %c40_105 = arith.constant 40 : index
    %c0_106 = arith.constant 0 : index
    %179 = vector.load %arg11[%c40_105, %c0_106] : memref<216x192xf32, #tpu.memory_space<vmem>>, vector<8x192xf32>
    tpu.vector_store %arg11[%c40_105, %c0_106], %178 {strides = array<i32>} : memref<216x192xf32, #tpu.memory_space<vmem>>, vector<8x192xf32>,
    %c0_107 = arith.constant 0 : index
    %c16_108 = arith.constant 16 : index
    %180 = vector.load %arg10[%c0_107, %c16_108] : memref<8x306xf32, #tpu.memory_space<vmem>>, vector<8x192xf32>
    %181 = vector.extract_strided_slice %2 {offsets = [6, 0], sizes = [1, 192], strides = [1, 1]} : vector<27x192xf32> to vector<1x192xf32>
    %182 = vector.broadcast %181 : vector<1x192xf32> to vector<8x192xf32>
    %183 = arith.mulf %180, %182 : vector<8x192xf32>
    %c48_109 = arith.constant 48 : index
    %c0_110 = arith.constant 0 : index
    %184 = vector.load %arg11[%c48_109, %c0_110] : memref<216x192xf32, #tpu.memory_space<vmem>>, vector<8x192xf32>
    tpu.vector_store %arg11[%c48_109, %c0_110], %183 {strides = array<i32>} : memref<216x192xf32, #tpu.memory_space<vmem>>, vector<8x192xf32>,
    %c0_111 = arith.constant 0 : index
    %c17_112 = arith.constant 17 : index
    %185 = vector.load %arg10[%c0_111, %c17_112] : memref<8x306xf32, #tpu.memory_space<vmem>>, vector<8x192xf32>
    %186 = vector.extract_strided_slice %2 {offsets = [7, 0], sizes = [1, 192], strides = [1, 1]} : vector<27x192xf32> to vector<1x192xf32>
    %187 = vector.broadcast %186 : vector<1x192xf32> to vector<8x192xf32>
    %188 = arith.mulf %185, %187 : vector<8x192xf32>
    %c56_113 = arith.constant 56 : index
    %c0_114 = arith.constant 0 : index
    %189 = vector.load %arg11[%c56_113, %c0_114] : memref<216x192xf32, #tpu.memory_space<vmem>>, vector<8x192xf32>
    tpu.vector_store %arg11[%c56_113, %c0_114], %188 {strides = array<i32>} : memref<216x192xf32, #tpu.memory_space<vmem>>, vector<8x192xf32>,
    %c0_115 = arith.constant 0 : index
    %c18_116 = arith.constant 18 : index
    %190 = vector.load %arg10[%c0_115, %c18_116] : memref<8x306xf32, #tpu.memory_space<vmem>>, vector<8x192xf32>
    %191 = vector.extract_strided_slice %2 {offsets = [8, 0], sizes = [1, 192], strides = [1, 1]} : vector<27x192xf32> to vector<1x192xf32>
    %192 = vector.broadcast %191 : vector<1x192xf32> to vector<8x192xf32>
    %193 = arith.mulf %190, %192 : vector<8x192xf32>
    %c64_117 = arith.constant 64 : index
    %c0_118 = arith.constant 0 : index
    %194 = vector.load %arg11[%c64_117, %c0_118] : memref<216x192xf32, #tpu.memory_space<vmem>>, vector<8x192xf32>
    tpu.vector_store %arg11[%c64_117, %c0_118], %193 {strides = array<i32>} : memref<216x192xf32, #tpu.memory_space<vmem>>, vector<8x192xf32>,
    %c0_119 = arith.constant 0 : index
    %c48_120 = arith.constant 48 : index
    %195 = vector.load %arg10[%c0_119, %c48_120] : memref<8x306xf32, #tpu.memory_space<vmem>>, vector<8x192xf32>
    %196 = vector.extract_strided_slice %2 {offsets = [9, 0], sizes = [1, 192], strides = [1, 1]} : vector<27x192xf32> to vector<1x192xf32>
    %197 = vector.broadcast %196 : vector<1x192xf32> to vector<8x192xf32>
    %198 = arith.mulf %195, %197 : vector<8x192xf32>
    %c72_121 = arith.constant 72 : index
    %c0_122 = arith.constant 0 : index
    %199 = vector.load %arg11[%c72_121, %c0_122] : memref<216x192xf32, #tpu.memory_space<vmem>>, vector<8x192xf32>
    tpu.vector_store %arg11[%c72_121, %c0_122], %198 {strides = array<i32>} : memref<216x192xf32, #tpu.memory_space<vmem>>, vector<8x192xf32>,
    %c0_123 = arith.constant 0 : index
    %c49_124 = arith.constant 49 : index
    %200 = vector.load %arg10[%c0_123, %c49_124] : memref<8x306xf32, #tpu.memory_space<vmem>>, vector<8x192xf32>
    %201 = vector.extract_strided_slice %2 {offsets = [10, 0], sizes = [1, 192], strides = [1, 1]} : vector<27x192xf32> to vector<1x192xf32>
    %202 = vector.broadcast %201 : vector<1x192xf32> to vector<8x192xf32>
    %203 = arith.mulf %200, %202 : vector<8x192xf32>
    %c80_125 = arith.constant 80 : index
    %c0_126 = arith.constant 0 : index
    %204 = vector.load %arg11[%c80_125, %c0_126] : memref<216x192xf32, #tpu.memory_space<vmem>>, vector<8x192xf32>
    tpu.vector_store %arg11[%c80_125, %c0_126], %203 {strides = array<i32>} : memref<216x192xf32, #tpu.memory_space<vmem>>, vector<8x192xf32>,
    %c0_127 = arith.constant 0 : index
    %c50_128 = arith.constant 50 : index
    %205 = vector.load %arg10[%c0_127, %c50_128] : memref<8x306xf32, #tpu.memory_space<vmem>>, vector<8x192xf32>
    %206 = vector.extract_strided_slice %2 {offsets = [11, 0], sizes = [1, 192], strides = [1, 1]} : vector<27x192xf32> to vector<1x192xf32>
    %207 = vector.broadcast %206 : vector<1x192xf32> to vector<8x192xf32>
    %208 = arith.mulf %205, %207 : vector<8x192xf32>
    %c88_129 = arith.constant 88 : index
    %c0_130 = arith.constant 0 : index
    %209 = vector.load %arg11[%c88_129, %c0_130] : memref<216x192xf32, #tpu.memory_space<vmem>>, vector<8x192xf32>
    tpu.vector_store %arg11[%c88_129, %c0_130], %208 {strides = array<i32>} : memref<216x192xf32, #tpu.memory_space<vmem>>, vector<8x192xf32>,
    %c0_131 = arith.constant 0 : index
    %c56_132 = arith.constant 56 : index
    %210 = vector.load %arg10[%c0_131, %c56_132] : memref<8x306xf32, #tpu.memory_space<vmem>>, vector<8x192xf32>
    %211 = vector.extract_strided_slice %2 {offsets = [12, 0], sizes = [1, 192], strides = [1, 1]} : vector<27x192xf32> to vector<1x192xf32>
    %212 = vector.broadcast %211 : vector<1x192xf32> to vector<8x192xf32>
    %213 = arith.mulf %210, %212 : vector<8x192xf32>
    %c96_133 = arith.constant 96 : index
    %c0_134 = arith.constant 0 : index
    %214 = vector.load %arg11[%c96_133, %c0_134] : memref<216x192xf32, #tpu.memory_space<vmem>>, vector<8x192xf32>
    tpu.vector_store %arg11[%c96_133, %c0_134], %213 {strides = array<i32>} : memref<216x192xf32, #tpu.memory_space<vmem>>, vector<8x192xf32>,
    %c104_135 = arith.constant 104 : index
    %c0_136 = arith.constant 0 : index
    %215 = vector.load %arg11[%c104_135, %c0_136] : memref<216x192xf32, #tpu.memory_space<vmem>>, vector<8x192xf32>
    tpu.vector_store %arg11[%c104_135, %c0_136], %148 {strides = array<i32>} : memref<216x192xf32, #tpu.memory_space<vmem>>, vector<8x192xf32>,
    %c0_137 = arith.constant 0 : index
    %c58_138 = arith.constant 58 : index
    %216 = vector.load %arg10[%c0_137, %c58_138] : memref<8x306xf32, #tpu.memory_space<vmem>>, vector<8x192xf32>
    %217 = vector.extract_strided_slice %2 {offsets = [14, 0], sizes = [1, 192], strides = [1, 1]} : vector<27x192xf32> to vector<1x192xf32>
    %218 = vector.broadcast %217 : vector<1x192xf32> to vector<8x192xf32>
    %219 = arith.mulf %216, %218 : vector<8x192xf32>
    %c112_139 = arith.constant 112 : index
    %c0_140 = arith.constant 0 : index
    %220 = vector.load %arg11[%c112_139, %c0_140] : memref<216x192xf32, #tpu.memory_space<vmem>>, vector<8x192xf32>
    tpu.vector_store %arg11[%c112_139, %c0_140], %219 {strides = array<i32>} : memref<216x192xf32, #tpu.memory_space<vmem>>, vector<8x192xf32>,
    %c0_141 = arith.constant 0 : index
    %c64_142 = arith.constant 64 : index
    %221 = vector.load %arg10[%c0_141, %c64_142] : memref<8x306xf32, #tpu.memory_space<vmem>>, vector<8x192xf32>
    %222 = vector.extract_strided_slice %2 {offsets = [15, 0], sizes = [1, 192], strides = [1, 1]} : vector<27x192xf32> to vector<1x192xf32>
    %223 = vector.broadcast %222 : vector<1x192xf32> to vector<8x192xf32>
    %224 = arith.mulf %221, %223 : vector<8x192xf32>
    %c120_143 = arith.constant 120 : index
    %c0_144 = arith.constant 0 : index
    %225 = vector.load %arg11[%c120_143, %c0_144] : memref<216x192xf32, #tpu.memory_space<vmem>>, vector<8x192xf32>
    tpu.vector_store %arg11[%c120_143, %c0_144], %224 {strides = array<i32>} : memref<216x192xf32, #tpu.memory_space<vmem>>, vector<8x192xf32>,
    %c0_145 = arith.constant 0 : index
    %c65_146 = arith.constant 65 : index
    %226 = vector.load %arg10[%c0_145, %c65_146] : memref<8x306xf32, #tpu.memory_space<vmem>>, vector<8x192xf32>
    %227 = vector.extract_strided_slice %2 {offsets = [16, 0], sizes = [1, 192], strides = [1, 1]} : vector<27x192xf32> to vector<1x192xf32>
    %228 = vector.broadcast %227 : vector<1x192xf32> to vector<8x192xf32>
    %229 = arith.mulf %226, %228 : vector<8x192xf32>
    %c128_147 = arith.constant 128 : index
    %c0_148 = arith.constant 0 : index
    %230 = vector.load %arg11[%c128_147, %c0_148] : memref<216x192xf32, #tpu.memory_space<vmem>>, vector<8x192xf32>
    tpu.vector_store %arg11[%c128_147, %c0_148], %229 {strides = array<i32>} : memref<216x192xf32, #tpu.memory_space<vmem>>, vector<8x192xf32>,
    %c0_149 = arith.constant 0 : index
    %c66_150 = arith.constant 66 : index
    %231 = vector.load %arg10[%c0_149, %c66_150] : memref<8x306xf32, #tpu.memory_space<vmem>>, vector<8x192xf32>
    %232 = vector.extract_strided_slice %2 {offsets = [17, 0], sizes = [1, 192], strides = [1, 1]} : vector<27x192xf32> to vector<1x192xf32>
    %233 = vector.broadcast %232 : vector<1x192xf32> to vector<8x192xf32>
    %234 = arith.mulf %231, %233 : vector<8x192xf32>
    %c136_151 = arith.constant 136 : index
    %c0_152 = arith.constant 0 : index
    %235 = vector.load %arg11[%c136_151, %c0_152] : memref<216x192xf32, #tpu.memory_space<vmem>>, vector<8x192xf32>
    tpu.vector_store %arg11[%c136_151, %c0_152], %234 {strides = array<i32>} : memref<216x192xf32, #tpu.memory_space<vmem>>, vector<8x192xf32>,
    %c0_153 = arith.constant 0 : index
    %c96_154 = arith.constant 96 : index
    %236 = vector.load %arg10[%c0_153, %c96_154] : memref<8x306xf32, #tpu.memory_space<vmem>>, vector<8x192xf32>
    %237 = vector.extract_strided_slice %2 {offsets = [18, 0], sizes = [1, 192], strides = [1, 1]} : vector<27x192xf32> to vector<1x192xf32>
    %238 = vector.broadcast %237 : vector<1x192xf32> to vector<8x192xf32>
    %239 = arith.mulf %236, %238 : vector<8x192xf32>
    %c144_155 = arith.constant 144 : index
    %c0_156 = arith.constant 0 : index
    %240 = vector.load %arg11[%c144_155, %c0_156] : memref<216x192xf32, #tpu.memory_space<vmem>>, vector<8x192xf32>
    tpu.vector_store %arg11[%c144_155, %c0_156], %239 {strides = array<i32>} : memref<216x192xf32, #tpu.memory_space<vmem>>, vector<8x192xf32>,
    %c0_157 = arith.constant 0 : index
    %c97_158 = arith.constant 97 : index
    %241 = vector.load %arg10[%c0_157, %c97_158] : memref<8x306xf32, #tpu.memory_space<vmem>>, vector<8x192xf32>
    %242 = vector.extract_strided_slice %2 {offsets = [19, 0], sizes = [1, 192], strides = [1, 1]} : vector<27x192xf32> to vector<1x192xf32>
    %243 = vector.broadcast %242 : vector<1x192xf32> to vector<8x192xf32>
    %244 = arith.mulf %241, %243 : vector<8x192xf32>
    %c152_159 = arith.constant 152 : index
    %c0_160 = arith.constant 0 : index
    %245 = vector.load %arg11[%c152_159, %c0_160] : memref<216x192xf32, #tpu.memory_space<vmem>>, vector<8x192xf32>
    tpu.vector_store %arg11[%c152_159, %c0_160], %244 {strides = array<i32>} : memref<216x192xf32, #tpu.memory_space<vmem>>, vector<8x192xf32>,
    %c0_161 = arith.constant 0 : index
    %c98_162 = arith.constant 98 : index
    %246 = vector.load %arg10[%c0_161, %c98_162] : memref<8x306xf32, #tpu.memory_space<vmem>>, vector<8x192xf32>
    %247 = vector.extract_strided_slice %2 {offsets = [20, 0], sizes = [1, 192], strides = [1, 1]} : vector<27x192xf32> to vector<1x192xf32>
    %248 = vector.broadcast %247 : vector<1x192xf32> to vector<8x192xf32>
    %249 = arith.mulf %246, %248 : vector<8x192xf32>
    %c160_163 = arith.constant 160 : index
    %c0_164 = arith.constant 0 : index
    %250 = vector.load %arg11[%c160_163, %c0_164] : memref<216x192xf32, #tpu.memory_space<vmem>>, vector<8x192xf32>
    tpu.vector_store %arg11[%c160_163, %c0_164], %249 {strides = array<i32>} : memref<216x192xf32, #tpu.memory_space<vmem>>, vector<8x192xf32>,
    %c0_165 = arith.constant 0 : index
    %c104_166 = arith.constant 104 : index
    %251 = vector.load %arg10[%c0_165, %c104_166] : memref<8x306xf32, #tpu.memory_space<vmem>>, vector<8x192xf32>
    %252 = vector.extract_strided_slice %2 {offsets = [21, 0], sizes = [1, 192], strides = [1, 1]} : vector<27x192xf32> to vector<1x192xf32>
    %253 = vector.broadcast %252 : vector<1x192xf32> to vector<8x192xf32>
    %254 = arith.mulf %251, %253 : vector<8x192xf32>
    %c168_167 = arith.constant 168 : index
    %c0_168 = arith.constant 0 : index
    %255 = vector.load %arg11[%c168_167, %c0_168] : memref<216x192xf32, #tpu.memory_space<vmem>>, vector<8x192xf32>
    tpu.vector_store %arg11[%c168_167, %c0_168], %254 {strides = array<i32>} : memref<216x192xf32, #tpu.memory_space<vmem>>, vector<8x192xf32>,
    %c0_169 = arith.constant 0 : index
    %c105_170 = arith.constant 105 : index
    %256 = vector.load %arg10[%c0_169, %c105_170] : memref<8x306xf32, #tpu.memory_space<vmem>>, vector<8x192xf32>
    %257 = vector.extract_strided_slice %2 {offsets = [22, 0], sizes = [1, 192], strides = [1, 1]} : vector<27x192xf32> to vector<1x192xf32>
    %258 = vector.broadcast %257 : vector<1x192xf32> to vector<8x192xf32>
    %259 = arith.mulf %256, %258 : vector<8x192xf32>
    %c176_171 = arith.constant 176 : index
    %c0_172 = arith.constant 0 : index
    %260 = vector.load %arg11[%c176_171, %c0_172] : memref<216x192xf32, #tpu.memory_space<vmem>>, vector<8x192xf32>
    tpu.vector_store %arg11[%c176_171, %c0_172], %259 {strides = array<i32>} : memref<216x192xf32, #tpu.memory_space<vmem>>, vector<8x192xf32>,
    %c0_173 = arith.constant 0 : index
    %c106_174 = arith.constant 106 : index
    %261 = vector.load %arg10[%c0_173, %c106_174] : memref<8x306xf32, #tpu.memory_space<vmem>>, vector<8x192xf32>
    %262 = vector.extract_strided_slice %2 {offsets = [23, 0], sizes = [1, 192], strides = [1, 1]} : vector<27x192xf32> to vector<1x192xf32>
    %263 = vector.broadcast %262 : vector<1x192xf32> to vector<8x192xf32>
    %264 = arith.mulf %261, %263 : vector<8x192xf32>
    %c184_175 = arith.constant 184 : index
    %c0_176 = arith.constant 0 : index
    %265 = vector.load %arg11[%c184_175, %c0_176] : memref<216x192xf32, #tpu.memory_space<vmem>>, vector<8x192xf32>
    tpu.vector_store %arg11[%c184_175, %c0_176], %264 {strides = array<i32>} : memref<216x192xf32, #tpu.memory_space<vmem>>, vector<8x192xf32>,
    %c0_177 = arith.constant 0 : index
    %c112_178 = arith.constant 112 : index
    %266 = vector.load %arg10[%c0_177, %c112_178] : memref<8x306xf32, #tpu.memory_space<vmem>>, vector<8x192xf32>
    %267 = vector.extract_strided_slice %2 {offsets = [24, 0], sizes = [1, 192], strides = [1, 1]} : vector<27x192xf32> to vector<1x192xf32>
    %268 = vector.broadcast %267 : vector<1x192xf32> to vector<8x192xf32>
    %269 = arith.mulf %266, %268 : vector<8x192xf32>
    %c192_179 = arith.constant 192 : index
    %c0_180 = arith.constant 0 : index
    %270 = vector.load %arg11[%c192_179, %c0_180] : memref<216x192xf32, #tpu.memory_space<vmem>>, vector<8x192xf32>
    tpu.vector_store %arg11[%c192_179, %c0_180], %269 {strides = array<i32>} : memref<216x192xf32, #tpu.memory_space<vmem>>, vector<8x192xf32>,
    %c0_181 = arith.constant 0 : index
    %c113_182 = arith.constant 113 : index
    %271 = vector.load %arg10[%c0_181, %c113_182] : memref<8x306xf32, #tpu.memory_space<vmem>>, vector<8x192xf32>
    %272 = vector.extract_strided_slice %2 {offsets = [25, 0], sizes = [1, 192], strides = [1, 1]} : vector<27x192xf32> to vector<1x192xf32>
    %273 = vector.broadcast %272 : vector<1x192xf32> to vector<8x192xf32>
    %274 = arith.mulf %271, %273 : vector<8x192xf32>
    %c200_183 = arith.constant 200 : index
    %c0_184 = arith.constant 0 : index
    %275 = vector.load %arg11[%c200_183, %c0_184] : memref<216x192xf32, #tpu.memory_space<vmem>>, vector<8x192xf32>
    tpu.vector_store %arg11[%c200_183, %c0_184], %274 {strides = array<i32>} : memref<216x192xf32, #tpu.memory_space<vmem>>, vector<8x192xf32>,
    %c0_185 = arith.constant 0 : index
    %c114_186 = arith.constant 114 : index
    %276 = vector.load %arg10[%c0_185, %c114_186] : memref<8x306xf32, #tpu.memory_space<vmem>>, vector<8x192xf32>
    %277 = vector.extract_strided_slice %2 {offsets = [26, 0], sizes = [1, 192], strides = [1, 1]} : vector<27x192xf32> to vector<1x192xf32>
    %278 = vector.broadcast %277 : vector<1x192xf32> to vector<8x192xf32>
    %279 = arith.mulf %276, %278 : vector<8x192xf32>
    %c208_187 = arith.constant 208 : index
    %c0_188 = arith.constant 0 : index
    %280 = vector.load %arg11[%c208_187, %c0_188] : memref<216x192xf32, #tpu.memory_space<vmem>>, vector<8x192xf32>
    tpu.vector_store %arg11[%c208_187, %c0_188], %279 {strides = array<i32>} : memref<216x192xf32, #tpu.memory_space<vmem>>, vector<8x192xf32>,
    %c0_189 = arith.constant 0 : index
    %c0_190 = arith.constant 0 : index
    %281 = vector.load %arg6[%c0_189, %c0_190] : memref<8x216xf32, #tpu.memory_space<vmem>>, vector<8x216xf32>
    %c0_191 = arith.constant 0 : index
    %c0_192 = arith.constant 0 : index
    %282 = vector.load %arg11[%c0_191, %c0_192] : memref<216x192xf32, #tpu.memory_space<vmem>>, vector<216x192xf32>
    %cst_193 = arith.constant dense<0.000000e+00> : vector<8x192xf32>
    %283 = tpu.matmul %281, %282, %cst_193 {dimension_numbers = #tpu.dot_dimension_numbers<[1], [0], [0], [1], [0, 0, 1, 1], [], []>} : vector<8x216xf32>, vector<216x192xf32>, vector<8x192xf32> -> vector<8x192xf32>
    %c0_194 = arith.constant 0 : index
    %c0_195 = arith.constant 0 : index
    %284 = vector.load %arg7[%c0_194, %c0_195] : memref<8x1xf32, #tpu.memory_space<vmem>>, vector<8x1xf32>
    %285 = vector.broadcast %284 : vector<8x1xf32> to vector<8x192xf32>
    %286 = arith.mulf %283, %285 : vector<8x192xf32>
    %c0_196 = arith.constant 0 : index
    %c0_197 = arith.constant 0 : index
    %287 = vector.load %arg8[%c0_196, %c0_197] : memref<8x1xf32, #tpu.memory_space<vmem>>, vector<8x1xf32>
    %288 = vector.broadcast %287 : vector<8x1xf32> to vector<8x192xf32>
    %289 = arith.addf %286, %288 : vector<8x192xf32>
    %290 = arith.addf %289, %1 : vector<8x192xf32>
    %cst_198 = arith.constant 0.000000e+00 : f32
    %291 = vector.broadcast %cst_198 : f32 to vector<8x192xf32>
    %292 = arith.maximumf %290, %291 : vector<8x192xf32>
    %c0_199 = arith.constant 0 : index
    %c0_200 = arith.constant 0 : index
    %c0_201 = arith.constant 0 : index
    %293 = vector.load %arg9[%c0_199, %c0_200, %c0_201] : memref<1x8x192xf32, #tpu.memory_space<vmem>>, vector<1x8x192xf32>
    %294 = vector.shape_cast %293 : vector<1x8x192xf32> to vector<8x192xf32>
    %295 = vector.shape_cast %292 : vector<8x192xf32> to vector<1x8x192xf32>
    tpu.vector_store %arg9[%c0_199, %c0_200, %c0_201], %295 {strides = array<i32>} : memref<1x8x192xf32, #tpu.memory_space<vmem>>, vector<1x8x192xf32>,
    return
  }
  func.func @transform_0(%arg0: i32) -> (i32, i32, i32) {
    %c0_i32 = arith.constant 0 : i32
    %c0_i32_0 = arith.constant 0 : i32
    %c0_i32_1 = arith.constant 0 : i32
    return %arg0, %c0_i32, %c0_i32_0 : i32, i32, i32
  }
  func.func @transform_1(%arg0: i32) -> (i32, i32) {
    %c0_i32 = arith.constant 0 : i32
    %c0_i32_0 = arith.constant 0 : i32
    %c0_i32_1 = arith.constant 0 : i32
    return %c0_i32, %c0_i32_0 : i32, i32
  }
  func.func @transform_2(%arg0: i32) -> (i32, i32) {
    %c0_i32 = arith.constant 0 : i32
    %c0_i32_0 = arith.constant 0 : i32
    %c0_i32_1 = arith.constant 0 : i32
    return %c0_i32, %c0_i32_0 : i32, i32
  }
  func.func @transform_3(%arg0: i32) -> (i32, i32) {
    %c0_i32 = arith.constant 0 : i32
    %c0_i32_0 = arith.constant 0 : i32
    %c0_i32_1 = arith.constant 0 : i32
    return %c0_i32, %c0_i32_0 : i32, i32
  }
  func.func @transform_4(%arg0: i32) -> (i32, i32) {
    %c0_i32 = arith.constant 0 : i32
    %c0_i32_0 = arith.constant 0 : i32
    %c0_i32_1 = arith.constant 0 : i32
    return %c0_i32, %c0_i32_0 : i32, i32
  }
  func.func @transform_5(%arg0: i32) -> (i32, i32) {
    %c0_i32 = arith.constant 0 : i32
    %c0_i32_0 = arith.constant 0 : i32
    %c0_i32_1 = arith.constant 0 : i32
    return %c0_i32, %c0_i32_0 : i32, i32
  }
  func.func @transform_6(%arg0: i32) -> (i32, i32) {
    %c0_i32 = arith.constant 0 : i32
    %c0_i32_0 = arith.constant 0 : i32
    %c0_i32_1 = arith.constant 0 : i32
    return %c0_i32, %c0_i32_0 : i32, i32
  }
  func.func @transform_7(%arg0: i32) -> (i32, i32) {
    %c0_i32 = arith.constant 0 : i32
    %c0_i32_0 = arith.constant 0 : i32
    %c0_i32_1 = arith.constant 0 : i32
    return %c0_i32, %c0_i32_0 : i32, i32
  }
  func.func @transform_8(%arg0: i32) -> (i32, i32, i32) {
    %c0_i32 = arith.constant 0 : i32
    %c0_i32_0 = arith.constant 0 : i32
    %c0_i32_1 = arith.constant 0 : i32
    return %arg0, %c0_i32, %c0_i32_0 : i32, i32, i32
  }
}

</mosaic_0001>

<llo_original>
// kernel: tpu_custom_call.1
$region0: #{tpu_custom_call.1}
  #allocation0 [shape = 'u32[]', space=smem, size = 0x4, offset = 0x4, fixed_abs, tag = 'smem constant byte address 0x4 - core index']
  #allocation1 [shape = 'u32[72,128]{1,0:T(1,128)}', space=vmem, size = 0x9000, scoped, tag = 'internal scratch']
  #allocation2 [shape = 'f32[8,306]{1,0:T(8,128)}', space=vmem, size = 0x3000, scoped, tag = 'scratch operand']
  #allocation3 [shape = 'f32[216,192]{1,0:T(8,128)}', space=vmem, size = 0x36000, scoped, tag = 'scratch operand']
  %s0 = inlined_call_operand.hbm [shape: f32[2,8,192], index: 0, kind: input, shape index: {}]
  %s1 = inlined_call_operand.hbm [shape: f32[27,192], index: 1, kind: input, shape index: {}]
  %s2 = inlined_call_operand.vmem [shape: f32[8,216], index: 2, kind: input, shape index: {}]
  %s3 = inlined_call_operand.vmem [shape: f32[8,1], index: 3, kind: input, shape index: {}]
  %s4 = inlined_call_operand.vmem [shape: f32[8,1], index: 4, kind: input, shape index: {}]
  %s5 = inlined_call_operand.vmem [shape: f32[8,216], index: 5, kind: input, shape index: {}]
  %s6 = inlined_call_operand.vmem [shape: f32[8,1], index: 6, kind: input, shape index: {}]
  %s7 = inlined_call_operand.vmem [shape: f32[8,1], index: 7, kind: input, shape index: {}]
  %s8 = inlined_call_operand.hbm [shape: f32[2,8,192], index: 8, kind: output, shape index: {}]
  %s9 = sld [smem:[#allocation0]]
  $region73: #{tpu_custom_call.1} parent=0
    _
  %s11 = ssub.s32 1, %s9
  %s12 = scalar_select 0, %s11, %s9
  $region1: #{tpu_custom_call.1} parent=0
    #allocation4 [shape = 'u8[16384]{0}', space=vmem, size = 0x4000, scoped, tag = 'input window, operand 0']
    #allocation5 [shape = 's32[2]{0}', space=sflag, size = 0x8, scoped, tag = 'scoped memory for tpu_custom_call.1']
    #allocation6 [shape = 's32[2]{0}', space=sflag, size = 0x8, scoped, tag = 'scoped memory for tpu_custom_call.1']
    #allocation7 [shape = 'u8[32768]{0}', space=vmem, size = 0x8000, scoped, tag = 'input window, operand 1, single buffered']
    #allocation8 [shape = 's32[1]{0}', space=sflag, size = 0x4, scoped, tag = 'scoped memory for tpu_custom_call.1']
    #allocation9 [shape = 'u8[16384]{0}', space=vmem, size = 0x4000, scoped, tag = 'output window, operand 0']
    %13 = vsyncpa [#allocation5], 0
    %s14 = scalar_lea.sflag [#allocation5], 1
    %15 = vsyncpa %s14, 0
    %16 = vsyncpa [#allocation8], 0
    %17 = vsyncpa [#allocation6], 0
    %s18 = scalar_lea.sflag [#allocation6], 1
    %19 = vsyncpa %s18, 0
    loop: start=0, step=1, limit=4
    $region2: #{tpu_custom_call.1} parent=1 // loop_pre_header
      _
    $region3: #{tpu_custom_call.1} parent=1 // loop_header
      %s21 = sphi 0, %s25
      %p22 = scmp.ge.s32.totalorder %s21, 4
      %s31 = sphi 0, %s33
      %s34 = sphi 0, %s31
      %s35 = sphi 0, %s34
      %s51 = sphi 0, %s35
      %s55 = sphi 0, %s55
      %s57 = sphi 0, %s55
      %s58 = sphi 0, %s57
      %s72 = sphi 0, %s58
      %s76 = sphi 0, %s76
      %s78 = sphi 0, %s76
      %s79 = sphi 0, %s78
      %s93 = sphi 0, %s79
      %s97 = sphi 0, %s97
      %s99 = sphi 0, %s97
      %s100 = sphi 0, %s99
      %s114 = sphi 0, %s100
      %s118 = sphi 0, %s118
      %s120 = sphi 0, %s118
      %s121 = sphi 0, %s120
      %s135 = sphi 0, %s121
      %s139 = sphi 0, %s139
      %s141 = sphi 0, %s139
      %s142 = sphi 0, %s141
      %s156 = sphi 0, %s142
      %s160 = sphi 0, %s160
      %s162 = sphi 0, %s160
      %s163 = sphi 0, %s162
      %s177 = sphi 0, %s163
      %s181 = sphi 0, %s181
      %s183 = sphi 0, %s181
      %s184 = sphi 0, %s183
      %s198 = sphi 0, %s184
      %s204 = sphi 0, %s206
      %s207 = sphi 0, %s204
      %s208 = sphi 0, %s207
      %s224 = sphi 0, %s208
    $region4: #{tpu_custom_call.1} parent=1 // loop_header_branch
      %24 = sbr.rel (%p22) target = $region8
    $region5: #{tpu_custom_call.1} parent=1 // loop_body
      %s26 = ssub.s32 %s21, 1
      %s27 = ssub.s32 %s21, 2
      %s28 = sadd.s32 %s21, 1
      %s29 = ssub.s32 %s21, %s28
      %p30 = scmp.eq.s32.totalorder %s29, 0
      %s32 = sadd.s32 %s31, 1
      %s33 = scalar_select %p30, %s31, %s32
      %p36 = pneg %p30
      %p37 = scmp.eq.s32.totalorder %s21, 1
      %p38 = por %p36, %p37
      %p39 = scmp.ne.s32.totalorder %s31, %s34
      %p40 = scmp.eq.s32.totalorder %s21, 0
      %p41 = por %p39, %p40
      %p42 = scmp.ne.s32.totalorder %s31, %s34
      %p43 = scmp.eq.s32.totalorder %s26, 1
      %p44 = por %p42, %p43
      %p45 = scmp.ne.s32.totalorder %s34, %s35
      %p46 = scmp.eq.s32.totalorder %s26, 0
      %p47 = por %p45, %p46
      %p48 = scmp.ne.s32.totalorder %s34, %s35
      %p49 = scmp.eq.s32.totalorder %s27, 1
      %p50 = por %p48, %p49
      %p52 = scmp.ne.s32.totalorder %s35, %s51
      %p53 = scmp.eq.s32.totalorder %s27, 0
      %p54 = por %p52, %p53
      %s56 = sadd.s32 %s55, 1
      %p59 = scmp.eq.s32.totalorder %s21, 1
      %p60 = scmp.ne.s32.totalorder %s55, %s57
      %p61 = scmp.eq.s32.totalorder %s21, 0
      %p62 = por %p60, %p61
      %p63 = scmp.ne.s32.totalorder %s55, %s57
      %p64 = scmp.eq.s32.totalorder %s26, 1
      %p65 = por %p63, %p64
      %p66 = scmp.ne.s32.totalorder %s57, %s58
      %p67 = scmp.eq.s32.totalorder %s26, 0
      %p68 = por %p66, %p67
      %p69 = scmp.ne.s32.totalorder %s57, %s58
      %p70 = scmp.eq.s32.totalorder %s27, 1
      %p71 = por %p69, %p70
      %p73 = scmp.ne.s32.totalorder %s58, %s72
      %p74 = scmp.eq.s32.totalorder %s27, 0
      %p75 = por %p73, %p74
      %s77 = sadd.s32 %s76, 1
      %p80 = scmp.eq.s32.totalorder %s21, 1
      %p81 = scmp.ne.s32.totalorder %s76, %s78
      %p82 = scmp.eq.s32.totalorder %s21, 0
      %p83 = por %p81, %p82
      %p84 = scmp.ne.s32.totalorder %s76, %s78
      %p85 = scmp.eq.s32.totalorder %s26, 1
      %p86 = por %p84, %p85
      %p87 = scmp.ne.s32.totalorder %s78, %s79
      %p88 = scmp.eq.s32.totalorder %s26, 0
      %p89 = por %p87, %p88
      %p90 = scmp.ne.s32.totalorder %s78, %s79
      %p91 = scmp.eq.s32.totalorder %s27, 1
      %p92 = por %p90, %p91
      %p94 = scmp.ne.s32.totalorder %s79, %s93
      %p95 = scmp.eq.s32.totalorder %s27, 0
      %p96 = por %p94, %p95
      %s98 = sadd.s32 %s97, 1
      %p101 = scmp.eq.s32.totalorder %s21, 1
      %p102 = scmp.ne.s32.totalorder %s97, %s99
      %p103 = scmp.eq.s32.totalorder %s21, 0
      %p104 = por %p102, %p103
      %p105 = scmp.ne.s32.totalorder %s97, %s99
      %p106 = scmp.eq.s32.totalorder %s26, 1
      %p107 = por %p105, %p106
      %p108 = scmp.ne.s32.totalorder %s99, %s100
      %p109 = scmp.eq.s32.totalorder %s26, 0
      %p110 = por %p108, %p109
      %p111 = scmp.ne.s32.totalorder %s99, %s100
      %p112 = scmp.eq.s32.totalorder %s27, 1
      %p113 = por %p111, %p112
      %p115 = scmp.ne.s32.totalorder %s100, %s114
      %p116 = scmp.eq.s32.totalorder %s27, 0
      %p117 = por %p115, %p116
      %s119 = sadd.s32 %s118, 1
      %p122 = scmp.eq.s32.totalorder %s21, 1
      %p123 = scmp.ne.s32.totalorder %s118, %s120
      %p124 = scmp.eq.s32.totalorder %s21, 0
      %p125 = por %p123, %p124
      %p126 = scmp.ne.s32.totalorder %s118, %s120
      %p127 = scmp.eq.s32.totalorder %s26, 1
      %p128 = por %p126, %p127
      %p129 = scmp.ne.s32.totalorder %s120, %s121
      %p130 = scmp.eq.s32.totalorder %s26, 0
      %p131 = por %p129, %p130
      %p132 = scmp.ne.s32.totalorder %s120, %s121
      %p133 = scmp.eq.s32.totalorder %s27, 1
      %p134 = por %p132, %p133
      %p136 = scmp.ne.s32.totalorder %s121, %s135
      %p137 = scmp.eq.s32.totalorder %s27, 0
      %p138 = por %p136, %p137
      %s140 = sadd.s32 %s139, 1
      %p143 = scmp.eq.s32.totalorder %s21, 1
      %p144 = scmp.ne.s32.totalorder %s139, %s141
      %p145 = scmp.eq.s32.totalorder %s21, 0
      %p146 = por %p144, %p145
      %p147 = scmp.ne.s32.totalorder %s139, %s141
      %p148 = scmp.eq.s32.totalorder %s26, 1
      %p149 = por %p147, %p148
      %p150 = scmp.ne.s32.totalorder %s141, %s142
      %p151 = scmp.eq.s32.totalorder %s26, 0
      %p152 = por %p150, %p151
      %p153 = scmp.ne.s32.totalorder %s141, %s142
      %p154 = scmp.eq.s32.totalorder %s27, 1
      %p155 = por %p153, %p154
      %p157 = scmp.ne.s32.totalorder %s142, %s156
      %p158 = scmp.eq.s32.totalorder %s27, 0
      %p159 = por %p157, %p158
      %s161 = sadd.s32 %s160, 1
      %p164 = scmp.eq.s32.totalorder %s21, 1
      %p165 = scmp.ne.s32.totalorder %s160, %s162
      %p166 = scmp.eq.s32.totalorder %s21, 0
      %p167 = por %p165, %p166
      %p168 = scmp.ne.s32.totalorder %s160, %s162
      %p169 = scmp.eq.s32.totalorder %s26, 1
      %p170 = por %p168, %p169
      %p171 = scmp.ne.s32.totalorder %s162, %s163
      %p172 = scmp.eq.s32.totalorder %s26, 0
      %p173 = por %p171, %p172
      %p174 = scmp.ne.s32.totalorder %s162, %s163
      %p175 = scmp.eq.s32.totalorder %s27, 1
      %p176 = por %p174, %p175
      %p178 = scmp.ne.s32.totalorder %s163, %s177
      %p179 = scmp.eq.s32.totalorder %s27, 0
      %p180 = por %p178, %p179
      %s182 = sadd.s32 %s181, 1
      %p185 = scmp.eq.s32.totalorder %s21, 1
      %p186 = scmp.ne.s32.totalorder %s181, %s183
      %p187 = scmp.eq.s32.totalorder %s21, 0
      %p188 = por %p186, %p187
      %p189 = scmp.ne.s32.totalorder %s181, %s183
      %p190 = scmp.eq.s32.totalorder %s26, 1
      %p191 = por %p189, %p190
      %p192 = scmp.ne.s32.totalorder %s183, %s184
      %p193 = scmp.eq.s32.totalorder %s26, 0
      %p194 = por %p192, %p193
      %p195 = scmp.ne.s32.totalorder %s183, %s184
      %p196 = scmp.eq.s32.totalorder %s27, 1
      %p197 = por %p195, %p196
      %p199 = scmp.ne.s32.totalorder %s184, %s198
      %p200 = scmp.eq.s32.totalorder %s27, 0
      %p201 = por %p199, %p200
      %s202 = ssub.s32 %s21, %s28
      %p203 = scmp.eq.s32.totalorder %s202, 0
      %s205 = sadd.s32 %s204, 1
      %s206 = scalar_select %p203, %s204, %s205
      %p209 = pneg %p203
      %p210 = scmp.eq.s32.totalorder %s21, 1
      %p211 = por %p209, %p210
      %p212 = scmp.ne.s32.totalorder %s204, %s207
      %p213 = scmp.eq.s32.totalorder %s21, 0
      %p214 = por %p212, %p213
      %p215 = scmp.ne.s32.totalorder %s204, %s207
      %p216 = scmp.eq.s32.totalorder %s26, 1
      %p217 = por %p215, %p216
      %p218 = scmp.ne.s32.totalorder %s207, %s208
      %p219 = scmp.eq.s32.totalorder %s26, 0
      %p220 = por %p218, %p219
      %p221 = scmp.ne.s32.totalorder %s207, %s208
      %p222 = scmp.eq.s32.totalorder %s27, 1
      %p223 = por %p221, %p222
      %p225 = scmp.ne.s32.totalorder %s208, %s224
      %p226 = scmp.eq.s32.totalorder %s27, 0
      %p227 = por %p225, %p226
      %p228 = scmp.le.s32.totalorder 1, %s21
      %p229 = scmp.lt.s32.totalorder %s21, 3
      %p230 = pnand %p228, %p229
      %p231 = pneg %p230
      // Predicated region
      $region9: #{tpu_custom_call.1} parent=5 // pred_check
        _
      $region10: #{tpu_custom_call.1} parent=5 // pred_check_branch
        %233 = sbr.rel (%p230) target = $region12
      $region11: #{tpu_custom_call.1} parent=5 // pred_region
        %s234 = ssub.s32 %s21, 1
        // Predicated region
        $region13: #{tpu_custom_call.1} parent=11 // pred_check
          %p235 = pneg %p68
        $region14: #{tpu_custom_call.1} parent=11 // pred_check_branch
          %237 = sbr.rel (%p235) target = $region16
        $region15: #{tpu_custom_call.1} parent=11 // pred_region
          %239 = vsyncadd [#allocation8], 0
          %s240 = sshll.u32 %s1, 4
          %s241 = int_to_ptr.hbm [resolvable:$true] %s240
          %s242 = sshll.u32 [#allocation7], 4
          %s243 = int_to_ptr.vmem [resolvable:$true] %s242
          %248 = dma.hbm_to_vmem [thread:$0]  %s241, 1024, %s243, [#allocation8], 256, 256, 16
        $region16: #{tpu_custom_call.1} parent=11 // pred_fallthru
          _
        // Predicated region
        $region17: #{tpu_custom_call.1} parent=11 // pred_check
          %p249 = pneg %p89
        $region18: #{tpu_custom_call.1} parent=11 // pred_check_branch
          %251 = sbr.rel (%p249) target = $region20
        $region19: #{tpu_custom_call.1} parent=11 // pred_region
          _
        $region20: #{tpu_custom_call.1} parent=11 // pred_fallthru
          _
        // Predicated region
        $region21: #{tpu_custom_call.1} parent=11 // pred_check
          %p252 = pneg %p110
        $region22: #{tpu_custom_call.1} parent=11 // pred_check_branch
          %254 = sbr.rel (%p252) target = $region24
        $region23: #{tpu_custom_call.1} parent=11 // pred_region
          _
        $region24: #{tpu_custom_call.1} parent=11 // pred_fallthru
          _
        // Predicated region
        $region25: #{tpu_custom_call.1} parent=11 // pred_check
          %p255 = pneg %p131
        $region26: #{tpu_custom_call.1} parent=11 // pred_check_branch
          %257 = sbr.rel (%p255) target = $region28
        $region27: #{tpu_custom_call.1} parent=11 // pred_region
          _
        $region28: #{tpu_custom_call.1} parent=11 // pred_fallthru
          _
        // Predicated region
        $region29: #{tpu_custom_call.1} parent=11 // pred_check
          %p258 = pneg %p152
        $region30: #{tpu_custom_call.1} parent=11 // pred_check_branch
          %260 = sbr.rel (%p258) target = $region32
        $region31: #{tpu_custom_call.1} parent=11 // pred_region
          _
        $region32: #{tpu_custom_call.1} parent=11 // pred_fallthru
          _
        // Predicated region
        $region33: #{tpu_custom_call.1} parent=11 // pred_check
          %p261 = pneg %p173
        $region34: #{tpu_custom_call.1} parent=11 // pred_check_branch
          %263 = sbr.rel (%p261) target = $region36
        $region35: #{tpu_custom_call.1} parent=11 // pred_region
          _
        $region36: #{tpu_custom_call.1} parent=11 // pred_fallthru
          _
        // Predicated region
        $region37: #{tpu_custom_call.1} parent=11 // pred_check
          %p264 = pneg %p194
        $region38: #{tpu_custom_call.1} parent=11 // pred_check_branch
          %266 = sbr.rel (%p264) target = $region40
        $region39: #{tpu_custom_call.1} parent=11 // pred_region
          _
        $region40: #{tpu_custom_call.1} parent=11 // pred_fallthru
          _
      $region12: #{tpu_custom_call.1} parent=5 // pred_fallthru
        _
      %p267 = scmp.lt.s32.totalorder %s21, 2
      // Predicated region
      $region41: #{tpu_custom_call.1} parent=5 // pred_check
        %p268 = pneg %p267
      $region42: #{tpu_custom_call.1} parent=5 // pred_check_branch
        %270 = sbr.rel (%p268) target = $region44
      $region43: #{tpu_custom_call.1} parent=5 // pred_region
        // Predicated region
        $region45: #{tpu_custom_call.1} parent=43 // pred_check
          %p271 = pneg %p41
        $region46: #{tpu_custom_call.1} parent=43 // pred_check_branch
          %273 = sbr.rel (%p271) target = $region48
        $region47: #{tpu_custom_call.1} parent=43 // pred_region
          %s274 = sand.u32 %s31, 1
          %s275 = scalar_lea.sflag [#allocation5], %s274
          %s276 = sand.u32 %s31, 1
          %s277 = smul.addr %s276, 16
          %s278 = scalar_lea.vmem [#allocation4], %s277
          %280 = vsyncadd %s275, 0
          %s281 = smul.addr %s21, 2
          %s282 = smul.addr %s281, 8
          %s283 = scalar_lea.hbm %s0, %s282
          %s285 = sshll.u32 %s283, 4
          %s286 = int_to_ptr.hbm [resolvable:$true] %s285
          %s287 = sshll.u32 %s278, 4
          %s288 = int_to_ptr.vmem [resolvable:$true] %s287
          %290 = dma.hbm_to_vmem [thread:$0]  %s286, 256, %s288, %s275
        $region48: #{tpu_custom_call.1} parent=43 // pred_fallthru
          _
      $region44: #{tpu_custom_call.1} parent=5 // pred_fallthru
        _
      %p291 = scmp.le.s32.totalorder 1, %s21
      %p292 = scmp.lt.s32.totalorder %s21, 3
      %p293 = pnand %p291, %p292
      %p294 = pneg %p293
      // Predicated region
      $region49: #{tpu_custom_call.1} parent=5 // pred_check
        _
      $region50: #{tpu_custom_call.1} parent=5 // pred_check_branch
        %296 = sbr.rel (%p293) target = $region52
      $region51: #{tpu_custom_call.1} parent=5 // pred_region
        %s297 = ssub.s32 %s21, 1
        %s298 = sand.u32 %s34, 1
        %s299 = scalar_lea.sflag [#allocation5], %s298
        %s300 = sand.u32 %s34, 1
        %s301 = smul.addr %s300, 16
        %s302 = scalar_lea.vmem [#allocation4], %s301
        // Predicated region
        $region53: #{tpu_custom_call.1} parent=51 // pred_check
          %p303 = pneg %p47
        $region54: #{tpu_custom_call.1} parent=51 // pred_check_branch
          %305 = sbr.rel (%p303) target = $region56
        $region55: #{tpu_custom_call.1} parent=51 // pred_region
          %307 = dma.done %s299, 256
        $region56: #{tpu_custom_call.1} parent=51 // pred_fallthru
          _
        // Predicated region
        $region57: #{tpu_custom_call.1} parent=51 // pred_check
          %p308 = pneg %p68
        $region58: #{tpu_custom_call.1} parent=51 // pred_check_branch
          %310 = sbr.rel (%p308) target = $region60
        $region59: #{tpu_custom_call.1} parent=51 // pred_region
          %312 = dma.done [#allocation8], 1024
        $region60: #{tpu_custom_call.1} parent=51 // pred_fallthru
          _
        %s313 = sand.u32 %s34, 1
        %s314 = scalar_lea.sflag [#allocation5], %s313
        %s315 = sand.u32 %s34, 1
        %s316 = smul.addr %s315, 16
        %s317 = scalar_lea.vmem [#allocation4], %s316
        %p318 = pneg %p47
        %p319 = pneg %p44
        %p320 = pneg %p68
        %p321 = pneg %p65
        %p322 = pneg %p89
        %p323 = pneg %p86
        %p324 = pneg %p110
        %p325 = pneg %p107
        %p326 = pneg %p131
        %p327 = pneg %p128
        %p328 = pneg %p152
        %p329 = pneg %p149
        %p330 = pneg %p173
        %p331 = pneg %p170
        %p332 = pneg %p194
        %p333 = pneg %p191
        %p334 = pneg %p220
        %p335 = pneg %p217
        %s336 = sand.u32 %s207, 1
        %s337 = scalar_lea.sflag [#allocation6], %s336
        %s338 = sand.u32 %s207, 1
        %s339 = smul.addr %s338, 16
        %s340 = scalar_lea.vmem [#allocation9], %s339
        %v341 = vld [vmem:[%s302] sm:$0xff]
        %v342 = vld [vmem:[%s302 + $0x8] sm:$0xff]
        %v343 = vld [vmem:[#allocation7] sm:$0xff]
        %v344 = vld [vmem:[#allocation7 + $0x8] sm:$0xff]
        %v345 = vld [vmem:[#allocation7 + $0x10] sm:$0xff]
        %v346 = vld [vmem:[#allocation7 + $0x18] sm:$0xff]
        %v347 = vld [vmem:[#allocation7 + $0x20] sm:$0xff]
        %v348 = vld [vmem:[#allocation7 + $0x28] sm:$0xff]
        %v349 = vld [vmem:[#allocation7 + $0x30] sm:$0x7]
        %v350 = vld [vmem:[#allocation7 + $0x38] sm:$0x7]
        %vm351 = vcmask 465920
        %352 = vst.msk [vmem:[#allocation2] sm:$0xff] %vm351, 0.0
        %vm353 = vcmask 1048520
        %354 = vst.msk [vmem:[#allocation2 + $0x8] sm:$0xff] %vm353, 0.0
        %vm355 = vcmask 408576
        %356 = vst.msk [vmem:[#allocation2 + $0x10] sm:$0xff] %vm355, 0.0
        %359 = vrot.lane.b32.xlu0 %v341, 57
        %v360 = vpop.permute.xlu0 %359
        %361 = vrot.lane.b32.xlu0 %v342, 57
        %v362 = vpop.permute.xlu0 %361
        %v363 = vsel %vm351, %v360, %v362
        %vm366 = vcmask 1048008
        %367 = vst.msk [vmem:[#allocation2] sm:$0xff] %vm366, %v360
        %vm368 = vcmask 990208
        %369 = vst.msk [vmem:[#allocation2 + $0x8] sm:$0xff] %vm368, %v363
        %v370 = vld [vmem:[#allocation2] sm:$0xff]
        %v371 = vld [vmem:[#allocation2 + $0x8] sm:$0xff]
        %v372 = vperm.slane %v343, 0
        %v373 = vperm.slane %v344, 0
        %v374 = vmul.f32 %v370, %v372
        %v375 = vmul.f32 %v371, %v373
        %376 = vst [vmem:[#allocation3] sm:$0xff] %v374
        %vm377 = vcmask 523264
        %378 = vst.msk [vmem:[#allocation3 + $0x8] sm:$0xff] %vm377, %v375
        %v379 = vld [vmem:[#allocation2] sm:$0xff]
        %v380 = vld [vmem:[#allocation2 + $0x8] sm:$0xff]
        %v381 = vperm.slane %v343, 1
        %v382 = vperm.slane %v344, 1
        %385 = vrot.lane.b32.xlu0 %v381, 1
        %v386 = vpop.permute.xlu0 %385
        %387 = vrot.lane.b32.xlu0 %v382, 1
        %v388 = vpop.permute.xlu0 %387
        %vm389 = vcmask 7168
        %v390 = vsel %vm389, %v386, %v388
        %v393 = vmul.f32 %v379, %v386
        %v394 = vmul.f32 %v380, %v390
        %397 = vrot.lane.b32.xlu0 %v393, 127
        %v398 = vpop.permute.xlu0 %397
        %399 = vrot.lane.b32.xlu0 %v394, 127
        %v400 = vpop.permute.xlu0 %399
        %vm401 = vcmask 1039360
        %v402 = vsel %vm401, %v398, %v400
        %405 = vst [vmem:[#allocation3 + $0x10] sm:$0xff] %v402
        %406 = vst.msk [vmem:[#allocation3 + $0x18] sm:$0xff] %vm377, %v400
        %v407 = vld [vmem:[#allocation2] sm:$0xff]
        %v408 = vld [vmem:[#allocation2 + $0x8] sm:$0xff]
        %v409 = vperm.slane %v343, 2
        %v410 = vperm.slane %v344, 2
        %413 = vrot.lane.b32.xlu0 %v409, 2
        %v414 = vpop.permute.xlu0 %413
        %415 = vrot.lane.b32.xlu0 %v410, 2
        %v416 = vpop.permute.xlu0 %415
        %vm417 = vcmask 15360
        %v418 = vsel %vm417, %v414, %v416
        %v421 = vmul.f32 %v407, %v414
        %v422 = vmul.f32 %v408, %v418
        %425 = vrot.lane.b32.xlu0 %v421, 126
        %v426 = vpop.permute.xlu0 %425
        %427 = vrot.lane.b32.xlu0 %v422, 126
        %v428 = vpop.permute.xlu0 %427
        %vm429 = vcmask 1031168
        %v430 = vsel %vm429, %v426, %v428
        %433 = vst [vmem:[#allocation3 + $0x20] sm:$0xff] %v430
        %434 = vst.msk [vmem:[#allocation3 + $0x28] sm:$0xff] %vm377, %v428
        %v435 = vld [vmem:[#allocation2] sm:$0xff]
        %v436 = vld [vmem:[#allocation2 + $0x8] sm:$0xff]
        %v437 = vperm.slane %v343, 3
        %v438 = vperm.slane %v344, 3
        %441 = vrot.lane.b32.xlu0 %v437, 8
        %v442 = vpop.permute.xlu0 %441
        %443 = vrot.lane.b32.xlu0 %v438, 8
        %v444 = vpop.permute.xlu0 %443
        %vm445 = vcmask 64512
        %v446 = vsel %vm445, %v442, %v444
        %v449 = vmul.f32 %v435, %v442
        %v450 = vmul.f32 %v436, %v446
        %453 = vrot.lane.b32.xlu0 %v449, 120
        %v454 = vpop.permute.xlu0 %453
        %455 = vrot.lane.b32.xlu0 %v450, 120
        %v456 = vpop.permute.xlu0 %455
        %vm457 = vcmask 982016
        %v458 = vsel %vm457, %v454, %v456
        %461 = vst [vmem:[#allocation3 + $0x30] sm:$0xff] %v458
        %462 = vst.msk [vmem:[#allocation3 + $0x38] sm:$0xff] %vm377, %v456
        %v463 = vld [vmem:[#allocation2] sm:$0xff]
        %v464 = vld [vmem:[#allocation2 + $0x8] sm:$0xff]
        %v465 = vperm.slane %v343, 4
        %v466 = vperm.slane %v344, 4
        %469 = vrot.lane.b32.xlu0 %v465, 9
        %v470 = vpop.permute.xlu0 %469
        %471 = vrot.lane.b32.xlu0 %v466, 9
        %v472 = vpop.permute.xlu0 %471
        %vm473 = vcmask 72704
        %v474 = vsel %vm473, %v470, %v472
        %v477 = vmul.f32 %v463, %v470
        %v478 = vmul.f32 %v464, %v474
        %481 = vrot.lane.b32.xlu0 %v477, 119
        %v482 = vpop.permute.xlu0 %481
        %483 = vrot.lane.b32.xlu0 %v478, 119
        %v484 = vpop.permute.xlu0 %483
        %vm485 = vcmask 973824
        %v486 = vsel %vm485, %v482, %v484
        %489 = vst [vmem:[#allocation3 + $0x40] sm:$0xff] %v486
        %490 = vst.msk [vmem:[#allocation3 + $0x48] sm:$0xff] %vm377, %v484
        %v491 = vld [vmem:[#allocation2] sm:$0xff]
        %v492 = vld [vmem:[#allocation2 + $0x8] sm:$0xff]
        %v493 = vperm.slane %v343, 5
        %v494 = vperm.slane %v344, 5
        %497 = vrot.lane.b32.xlu0 %v493, 10
        %v498 = vpop.permute.xlu0 %497
        %499 = vrot.lane.b32.xlu0 %v494, 10
        %v500 = vpop.permute.xlu0 %499
        %vm501 = vcmask 80896
        %v502 = vsel %vm501, %v498, %v500
        %v505 = vmul.f32 %v491, %v498
        %v506 = vmul.f32 %v492, %v502
        %509 = vrot.lane.b32.xlu0 %v505, 118
        %v510 = vpop.permute.xlu0 %509
        %511 = vrot.lane.b32.xlu0 %v506, 118
        %v512 = vpop.permute.xlu0 %511
        %vm513 = vcmask 965632
        %v514 = vsel %vm513, %v510, %v512
        %517 = vst [vmem:[#allocation3 + $0x50] sm:$0xff] %v514
        %518 = vst.msk [vmem:[#allocation3 + $0x58] sm:$0xff] %vm377, %v512
        %v519 = vld [vmem:[#allocation2] sm:$0xff]
        %v520 = vld [vmem:[#allocation2 + $0x8] sm:$0xff]
        %v521 = vperm.slane %v343, 6
        %v522 = vperm.slane %v344, 6
        %525 = vrot.lane.b32.xlu0 %v521, 16
        %v526 = vpop.permute.xlu0 %525
        %527 = vrot.lane.b32.xlu0 %v522, 16
        %v528 = vpop.permute.xlu0 %527
        %vm529 = vcmask 130048
        %v530 = vsel %vm529, %v526, %v528
        %v533 = vmul.f32 %v519, %v526
        %v534 = vmul.f32 %v520, %v530
        %537 = vrot.lane.b32.xlu0 %v533, 112
        %v538 = vpop.permute.xlu0 %537
        %539 = vrot.lane.b32.xlu0 %v534, 112
        %v540 = vpop.permute.xlu0 %539
        %vm541 = vcmask 916480
        %v542 = vsel %vm541, %v538, %v540
        %545 = vst [vmem:[#allocation3 + $0x60] sm:$0xff] %v542
        %546 = vst.msk [vmem:[#allocation3 + $0x68] sm:$0xff] %vm377, %v540
        %v547 = vld [vmem:[#allocation2] sm:$0xff]
        %v548 = vld [vmem:[#allocation2 + $0x8] sm:$0xff]
        %v549 = vperm.slane %v343, 7
        %v550 = vperm.slane %v344, 7
        %553 = vrot.lane.b32.xlu0 %v549, 17
        %v554 = vpop.permute.xlu0 %553
        %555 = vrot.lane.b32.xlu0 %v550, 17
        %v556 = vpop.permute.xlu0 %555
        %vm557 = vcmask 138240
        %v558 = vsel %vm557, %v554, %v556
        %v561 = vmul.f32 %v547, %v554
        %v562 = vmul.f32 %v548, %v558
        %565 = vrot.lane.b32.xlu0 %v561, 111
        %v566 = vpop.permute.xlu0 %565
        %567 = vrot.lane.b32.xlu0 %v562, 111
        %v568 = vpop.permute.xlu0 %567
        %vm569 = vcmask 908288
        %v570 = vsel %vm569, %v566, %v568
        %573 = vst [vmem:[#allocation3 + $0x70] sm:$0xff] %v570
        %574 = vst.msk [vmem:[#allocation3 + $0x78] sm:$0xff] %vm377, %v568
        %v575 = vld [vmem:[#allocation2] sm:$0xff]
        %v576 = vld [vmem:[#allocation2 + $0x8] sm:$0xff]
        %v577 = vperm.slane %v345, 0
        %v578 = vperm.slane %v346, 0
        %581 = vrot.lane.b32.xlu0 %v577, 18
        %v582 = vpop.permute.xlu0 %581
        %583 = vrot.lane.b32.xlu0 %v578, 18
        %v584 = vpop.permute.xlu0 %583
        %vm585 = vcmask 146432
        %v586 = vsel %vm585, %v582, %v584
        %v589 = vmul.f32 %v575, %v582
        %v590 = vmul.f32 %v576, %v586
        %593 = vrot.lane.b32.xlu0 %v589, 110
        %v594 = vpop.permute.xlu0 %593
        %595 = vrot.lane.b32.xlu0 %v590, 110
        %v596 = vpop.permute.xlu0 %595
        %vm597 = vcmask 900096
        %v598 = vsel %vm597, %v594, %v596
        %601 = vst [vmem:[#allocation3 + $0x80] sm:$0xff] %v598
        %602 = vst.msk [vmem:[#allocation3 + $0x88] sm:$0xff] %vm377, %v596
        %v603 = vld [vmem:[#allocation2] sm:$0xff]
        %v604 = vld [vmem:[#allocation2 + $0x8] sm:$0xff]
        %v605 = vperm.slane %v345, 1
        %v606 = vperm.slane %v346, 1
        %609 = vrot.lane.b32.xlu0 %v605, 48
        %v610 = vpop.permute.xlu0 %609
        %611 = vrot.lane.b32.xlu0 %v606, 48
        %v612 = vpop.permute.xlu0 %611
        %vm613 = vcmask 392192
        %v614 = vsel %vm613, %v610, %v612
        %v617 = vmul.f32 %v603, %v610
        %v618 = vmul.f32 %v604, %v614
        %621 = vrot.lane.b32.xlu0 %v617, 80
        %v622 = vpop.permute.xlu0 %621
        %623 = vrot.lane.b32.xlu0 %v618, 80
        %v624 = vpop.permute.xlu0 %623
        %vm625 = vcmask 654336
        %v626 = vsel %vm625, %v622, %v624
        %629 = vst [vmem:[#allocation3 + $0x90] sm:$0xff] %v626
        %630 = vst.msk [vmem:[#allocation3 + $0x98] sm:$0xff] %vm377, %v624
        %v631 = vld [vmem:[#allocation2] sm:$0xff]
        %v632 = vld [vmem:[#allocation2 + $0x8] sm:$0xff]
        %v633 = vperm.slane %v345, 2
        %v634 = vperm.slane %v346, 2
        %637 = vrot.lane.b32.xlu0 %v633, 49
        %v638 = vpop.permute.xlu0 %637
        %639 = vrot.lane.b32.xlu0 %v634, 49
        %v640 = vpop.permute.xlu0 %639
        %vm641 = vcmask 400384
        %v642 = vsel %vm641, %v638, %v640
        %v645 = vmul.f32 %v631, %v638
        %v646 = vmul.f32 %v632, %v642
        %649 = vrot.lane.b32.xlu0 %v645, 79
        %v650 = vpop.permute.xlu0 %649
        %651 = vrot.lane.b32.xlu0 %v646, 79
        %v652 = vpop.permute.xlu0 %651
        %vm653 = vcmask 646144
        %v654 = vsel %vm653, %v650, %v652
        %657 = vst [vmem:[#allocation3 + $0xa0] sm:$0xff] %v654
        %658 = vst.msk [vmem:[#allocation3 + $0xa8] sm:$0xff] %vm377, %v652
        %v659 = vld [vmem:[#allocation2] sm:$0xff]
        %v660 = vld [vmem:[#allocation2 + $0x8] sm:$0xff]
        %v661 = vperm.slane %v345, 3
        %v662 = vperm.slane %v346, 3
        %665 = vrot.lane.b32.xlu0 %v661, 50
        %v666 = vpop.permute.xlu0 %665
        %667 = vrot.lane.b32.xlu0 %v662, 50
        %v668 = vpop.permute.xlu0 %667
        %v669 = vsel %vm355, %v666, %v668
        %v672 = vmul.f32 %v659, %v666
        %v673 = vmul.f32 %v660, %v669
        %676 = vrot.lane.b32.xlu0 %v672, 78
        %v677 = vpop.permute.xlu0 %676
        %678 = vrot.lane.b32.xlu0 %v673, 78
        %v679 = vpop.permute.xlu0 %678
        %vm680 = vcmask 637952
        %v681 = vsel %vm680, %v677, %v679
        %684 = vst [vmem:[#allocation3 + $0xb0] sm:$0xff] %v681
        %685 = vst.msk [vmem:[#allocation3 + $0xb8] sm:$0xff] %vm377, %v679
        %v686 = vld [vmem:[#allocation2] sm:$0xff]
        %v687 = vld [vmem:[#allocation2 + $0x8] sm:$0xff]
        %v688 = vperm.slane %v345, 4
        %v689 = vperm.slane %v346, 4
        %692 = vrot.lane.b32.xlu0 %v688, 56
        %v693 = vpop.permute.xlu0 %692
        %694 = vrot.lane.b32.xlu0 %v689, 56
        %v695 = vpop.permute.xlu0 %694
        %vm696 = vcmask 457728
        %v697 = vsel %vm696, %v693, %v695
        %v700 = vmul.f32 %v686, %v693
        %v701 = vmul.f32 %v687, %v697
        %704 = vrot.lane.b32.xlu0 %v700, 72
        %v705 = vpop.permute.xlu0 %704
        %706 = vrot.lane.b32.xlu0 %v701, 72
        %v707 = vpop.permute.xlu0 %706
        %vm708 = vcmask 588800
        %v709 = vsel %vm708, %v705, %v707
        %712 = vst [vmem:[#allocation3 + $0xc0] sm:$0xff] %v709
        %713 = vst.msk [vmem:[#allocation3 + $0xc8] sm:$0xff] %vm377, %v707
        %714 = vst [vmem:[#allocation3 + $0xd0] sm:$0xff] %v341
        %715 = vst.msk [vmem:[#allocation3 + $0xd8] sm:$0xff] %vm377, %v342
        %v716 = vld [vmem:[#allocation2] sm:$0xff]
        %v717 = vld [vmem:[#allocation2 + $0x8] sm:$0xff]
        %v718 = vperm.slane %v345, 6
        %v719 = vperm.slane %v346, 6
        %722 = vrot.lane.b32.xlu0 %v718, 58
        %v723 = vpop.permute.xlu0 %722
        %724 = vrot.lane.b32.xlu0 %v719, 58
        %v725 = vpop.permute.xlu0 %724
        %vm726 = vcmask 474112
        %v727 = vsel %vm726, %v723, %v725
        %v730 = vmul.f32 %v716, %v723
        %v731 = vmul.f32 %v717, %v727
        %734 = vrot.lane.b32.xlu0 %v730, 70
        %v735 = vpop.permute.xlu0 %734
        %736 = vrot.lane.b32.xlu0 %v731, 70
        %v737 = vpop.permute.xlu0 %736
        %vm738 = vcmask 572416
        %v739 = vsel %vm738, %v735, %v737
        %742 = vst [vmem:[#allocation3 + $0xe0] sm:$0xff] %v739
        %743 = vst.msk [vmem:[#allocation3 + $0xe8] sm:$0xff] %vm377, %v737
        %v744 = vld [vmem:[#allocation2] sm:$0xff]
        %v745 = vld [vmem:[#allocation2 + $0x8] sm:$0xff]
        %v746 = vperm.slane %v345, 7
        %v747 = vperm.slane %v346, 7
        %750 = vrot.lane.b32.xlu0 %v746, 64
        %v751 = vpop.permute.xlu0 %750
        %752 = vrot.lane.b32.xlu0 %v747, 64
        %v753 = vpop.permute.xlu0 %752
        %v754 = vsel %vm377, %v751, %v753
        %v757 = vmul.f32 %v744, %v751
        %v758 = vmul.f32 %v745, %v754
        %761 = vrot.lane.b32.xlu0 %v757, 64
        %v762 = vpop.permute.xlu0 %761
        %763 = vrot.lane.b32.xlu0 %v758, 64
        %v764 = vpop.permute.xlu0 %763
        %v765 = vsel %vm377, %v762, %v764
        %768 = vst [vmem:[#allocation3 + $0xf0] sm:$0xff] %v765
        %769 = vst.msk [vmem:[#allocation3 + $0xf8] sm:$0xff] %vm377, %v764
        %v770 = vld [vmem:[#allocation2] sm:$0xff]
        %v771 = vld [vmem:[#allocation2 + $0x8] sm:$0xff]
        %v772 = vld [vmem:[#allocation2 + $0x10] sm:$0xff]
        %v773 = vperm.slane %v347, 0
        %v774 = vperm.slane %v348, 0
        %777 = vrot.lane.b32.xlu0 %v773, 65
        %v778 = vpop.permute.xlu0 %777
        %779 = vrot.lane.b32.xlu0 %v774, 65
        %v780 = vpop.permute.xlu0 %779
        %vm781 = vcmask 531456
        %v782 = vsel %vm781, %v778, %v780
        %v786 = vmul.f32 %v770, %v778
        %v787 = vmul.f32 %v771, %v782
        %v788 = vmul.f32 %v772, %v780
        %792 = vrot.lane.b32.xlu0 %v786, 63
        %v793 = vpop.permute.xlu0 %792
        %794 = vrot.lane.b32.xlu0 %v787, 63
        %v795 = vpop.permute.xlu0 %794
        %796 = vrot.lane.b32.xlu0 %v788, 63
        %v797 = vpop.permute.xlu0 %796
        %vm798 = vcmask 515072
        %v799 = vsel %vm798, %v793, %v795
        %v800 = vsel %vm798, %v795, %v797
        %803 = vst [vmem:[#allocation3 + $0x100] sm:$0xff] %v799
        %804 = vst.msk [vmem:[#allocation3 + $0x108] sm:$0xff] %vm377, %v800
        %v805 = vld [vmem:[#allocation2] sm:$0xff]
        %v806 = vld [vmem:[#allocation2 + $0x8] sm:$0xff]
        %v807 = vld [vmem:[#allocation2 + $0x10] sm:$0xff]
        %v808 = vperm.slane %v347, 1
        %v809 = vperm.slane %v348, 1
        %812 = vrot.lane.b32.xlu0 %v808, 66
        %v813 = vpop.permute.xlu0 %812
        %814 = vrot.lane.b32.xlu0 %v809, 66
        %v815 = vpop.permute.xlu0 %814
        %vm816 = vcmask 539648
        %v817 = vsel %vm816, %v813, %v815
        %v821 = vmul.f32 %v805, %v813
        %v822 = vmul.f32 %v806, %v817
        %v823 = vmul.f32 %v807, %v815
        %827 = vrot.lane.b32.xlu0 %v821, 62
        %v828 = vpop.permute.xlu0 %827
        %829 = vrot.lane.b32.xlu0 %v822, 62
        %v830 = vpop.permute.xlu0 %829
        %831 = vrot.lane.b32.xlu0 %v823, 62
        %v832 = vpop.permute.xlu0 %831
        %vm833 = vcmask 506880
        %v834 = vsel %vm833, %v828, %v830
        %v835 = vsel %vm833, %v830, %v832
        %838 = vst [vmem:[#allocation3 + $0x110] sm:$0xff] %v834
        %839 = vst.msk [vmem:[#allocation3 + $0x118] sm:$0xff] %vm377, %v835
        %v840 = vld [vmem:[#allocation2] sm:$0xff]
        %v841 = vld [vmem:[#allocation2 + $0x8] sm:$0xff]
        %v842 = vld [vmem:[#allocation2 + $0x10] sm:$0xff]
        %v843 = vperm.slane %v347, 2
        %v844 = vperm.slane %v348, 2
        %847 = vrot.lane.b32.xlu0 %v843, 96
        %v848 = vpop.permute.xlu0 %847
        %849 = vrot.lane.b32.xlu0 %v844, 96
        %v850 = vpop.permute.xlu0 %849
        %vm851 = vcmask 785408
        %v852 = vsel %vm851, %v848, %v850
        %v856 = vmul.f32 %v840, %v848
        %v857 = vmul.f32 %v841, %v852
        %v858 = vmul.f32 %v842, %v850
        %862 = vrot.lane.b32.xlu0 %v856, 32
        %v863 = vpop.permute.xlu0 %862
        %864 = vrot.lane.b32.xlu0 %v857, 32
        %v865 = vpop.permute.xlu0 %864
        %866 = vrot.lane.b32.xlu0 %v858, 32
        %v867 = vpop.permute.xlu0 %866
        %vm868 = vcmask 261120
        %v869 = vsel %vm868, %v863, %v865
        %v870 = vsel %vm868, %v865, %v867
        %873 = vst [vmem:[#allocation3 + $0x120] sm:$0xff] %v869
        %874 = vst.msk [vmem:[#allocation3 + $0x128] sm:$0xff] %vm377, %v870
        %v875 = vld [vmem:[#allocation2] sm:$0xff]
        %v876 = vld [vmem:[#allocation2 + $0x8] sm:$0xff]
        %v877 = vld [vmem:[#allocation2 + $0x10] sm:$0xff]
        %v878 = vperm.slane %v347, 3
        %v879 = vperm.slane %v348, 3
        %882 = vrot.lane.b32.xlu0 %v878, 97
        %v883 = vpop.permute.xlu0 %882
        %884 = vrot.lane.b32.xlu0 %v879, 97
        %v885 = vpop.permute.xlu0 %884
        %vm886 = vcmask 793600
        %v887 = vsel %vm886, %v883, %v885
        %v891 = vmul.f32 %v875, %v883
        %v892 = vmul.f32 %v876, %v887
        %v893 = vmul.f32 %v877, %v885
        %897 = vrot.lane.b32.xlu0 %v891, 31
        %v898 = vpop.permute.xlu0 %897
        %899 = vrot.lane.b32.xlu0 %v892, 31
        %v900 = vpop.permute.xlu0 %899
        %901 = vrot.lane.b32.xlu0 %v893, 31
        %v902 = vpop.permute.xlu0 %901
        %vm903 = vcmask 252928
        %v904 = vsel %vm903, %v898, %v900
        %v905 = vsel %vm903, %v900, %v902
        %908 = vst [vmem:[#allocation3 + $0x130] sm:$0xff] %v904
        %909 = vst.msk [vmem:[#allocation3 + $0x138] sm:$0xff] %vm377, %v905
        %v910 = vld [vmem:[#allocation2] sm:$0xff]
        %v911 = vld [vmem:[#allocation2 + $0x8] sm:$0xff]
        %v912 = vld [vmem:[#allocation2 + $0x10] sm:$0xff]
        %v913 = vperm.slane %v347, 4
        %v914 = vperm.slane %v348, 4
        %917 = vrot.lane.b32.xlu0 %v913, 98
        %v918 = vpop.permute.xlu0 %917
        %919 = vrot.lane.b32.xlu0 %v914, 98
        %v920 = vpop.permute.xlu0 %919
        %vm921 = vcmask 801792
        %v922 = vsel %vm921, %v918, %v920
        %v926 = vmul.f32 %v910, %v918
        %v927 = vmul.f32 %v911, %v922
        %v928 = vmul.f32 %v912, %v920
        %932 = vrot.lane.b32.xlu0 %v926, 30
        %v933 = vpop.permute.xlu0 %932
        %934 = vrot.lane.b32.xlu0 %v927, 30
        %v935 = vpop.permute.xlu0 %934
        %936 = vrot.lane.b32.xlu0 %v928, 30
        %v937 = vpop.permute.xlu0 %936
        %vm938 = vcmask 244736
        %v939 = vsel %vm938, %v933, %v935
        %v940 = vsel %vm938, %v935, %v937
        %943 = vst [vmem:[#allocation3 + $0x140] sm:$0xff] %v939
        %944 = vst.msk [vmem:[#allocation3 + $0x148] sm:$0xff] %vm377, %v940
        %v945 = vld [vmem:[#allocation2] sm:$0xff]
        %v946 = vld [vmem:[#allocation2 + $0x8] sm:$0xff]
        %v947 = vld [vmem:[#allocation2 + $0x10] sm:$0xff]
        %v948 = vperm.slane %v347, 5
        %v949 = vperm.slane %v348, 5
        %952 = vrot.lane.b32.xlu0 %v948, 104
        %v953 = vpop.permute.xlu0 %952
        %954 = vrot.lane.b32.xlu0 %v949, 104
        %v955 = vpop.permute.xlu0 %954
        %vm956 = vcmask 850944
        %v957 = vsel %vm956, %v953, %v955
        %v961 = vmul.f32 %v945, %v953
        %v962 = vmul.f32 %v946, %v957
        %v963 = vmul.f32 %v947, %v955
        %967 = vrot.lane.b32.xlu0 %v961, 24
        %v968 = vpop.permute.xlu0 %967
        %969 = vrot.lane.b32.xlu0 %v962, 24
        %v970 = vpop.permute.xlu0 %969
        %971 = vrot.lane.b32.xlu0 %v963, 24
        %v972 = vpop.permute.xlu0 %971
        %vm973 = vcmask 195584
        %v974 = vsel %vm973, %v968, %v970
        %v975 = vsel %vm973, %v970, %v972
        %978 = vst [vmem:[#allocation3 + $0x150] sm:$0xff] %v974
        %979 = vst.msk [vmem:[#allocation3 + $0x158] sm:$0xff] %vm377, %v975
        %v980 = vld [vmem:[#allocation2] sm:$0xff]
        %v981 = vld [vmem:[#allocation2 + $0x8] sm:$0xff]
        %v982 = vld [vmem:[#allocation2 + $0x10] sm:$0xff]
        %v983 = vperm.slane %v347, 6
        %v984 = vperm.slane %v348, 6
        %987 = vrot.lane.b32.xlu0 %v983, 105
        %v988 = vpop.permute.xlu0 %987
        %989 = vrot.lane.b32.xlu0 %v984, 105
        %v990 = vpop.permute.xlu0 %989
        %vm991 = vcmask 859136
        %v992 = vsel %vm991, %v988, %v990
        %v996 = vmul.f32 %v980, %v988
        %v997 = vmul.f32 %v981, %v992
        %v998 = vmul.f32 %v982, %v990
        %1002 = vrot.lane.b32.xlu0 %v996, 23
        %v1003 = vpop.permute.xlu0 %1002
        %1004 = vrot.lane.b32.xlu0 %v997, 23
        %v1005 = vpop.permute.xlu0 %1004
        %1006 = vrot.lane.b32.xlu0 %v998, 23
        %v1007 = vpop.permute.xlu0 %1006
        %vm1008 = vcmask 187392
        %v1009 = vsel %vm1008, %v1003, %v1005
        %v1010 = vsel %vm1008, %v1005, %v1007
        %1013 = vst [vmem:[#allocation3 + $0x160] sm:$0xff] %v1009
        %1014 = vst.msk [vmem:[#allocation3 + $0x168] sm:$0xff] %vm377, %v1010
        %v1015 = vld [vmem:[#allocation2] sm:$0xff]
        %v1016 = vld [vmem:[#allocation2 + $0x8] sm:$0xff]
        %v1017 = vld [vmem:[#allocation2 + $0x10] sm:$0xff]
        %v1018 = vperm.slane %v347, 7
        %v1019 = vperm.slane %v348, 7
        %1022 = vrot.lane.b32.xlu0 %v1018, 106
        %v1023 = vpop.permute.xlu0 %1022
        %1024 = vrot.lane.b32.xlu0 %v1019, 106
        %v1025 = vpop.permute.xlu0 %1024
        %vm1026 = vcmask 867328
        %v1027 = vsel %vm1026, %v1023, %v1025
        %v1031 = vmul.f32 %v1015, %v1023
        %v1032 = vmul.f32 %v1016, %v1027
        %v1033 = vmul.f32 %v1017, %v1025
        %1037 = vrot.lane.b32.xlu0 %v1031, 22
        %v1038 = vpop.permute.xlu0 %1037
        %1039 = vrot.lane.b32.xlu0 %v1032, 22
        %v1040 = vpop.permute.xlu0 %1039
        %1041 = vrot.lane.b32.xlu0 %v1033, 22
        %v1042 = vpop.permute.xlu0 %1041
        %vm1043 = vcmask 179200
        %v1044 = vsel %vm1043, %v1038, %v1040
        %v1045 = vsel %vm1043, %v1040, %v1042
        %1048 = vst [vmem:[#allocation3 + $0x170] sm:$0xff] %v1044
        %1049 = vst.msk [vmem:[#allocation3 + $0x178] sm:$0xff] %vm377, %v1045
        %v1050 = vld [vmem:[#allocation2] sm:$0xff]
        %v1051 = vld [vmem:[#allocation2 + $0x8] sm:$0xff]
        %v1052 = vld [vmem:[#allocation2 + $0x10] sm:$0xff]
        %v1053 = vperm.slane %v349, 0
        %v1054 = vperm.slane %v350, 0
        %1057 = vrot.lane.b32.xlu0 %v1053, 112
        %v1058 = vpop.permute.xlu0 %1057
        %1059 = vrot.lane.b32.xlu0 %v1054, 112
        %v1060 = vpop.permute.xlu0 %1059
        %v1061 = vsel %vm541, %v1058, %v1060
        %v1065 = vmul.f32 %v1050, %v1058
        %v1066 = vmul.f32 %v1051, %v1061
        %v1067 = vmul.f32 %v1052, %v1060
        %1071 = vrot.lane.b32.xlu0 %v1065, 16
        %v1072 = vpop.permute.xlu0 %1071
        %1073 = vrot.lane.b32.xlu0 %v1066, 16
        %v1074 = vpop.permute.xlu0 %1073
        %1075 = vrot.lane.b32.xlu0 %v1067, 16
        %v1076 = vpop.permute.xlu0 %1075
        %v1077 = vsel %vm529, %v1072, %v1074
        %v1078 = vsel %vm529, %v1074, %v1076
        %1081 = vst [vmem:[#allocation3 + $0x180] sm:$0xff] %v1077
        %1082 = vst.msk [vmem:[#allocation3 + $0x188] sm:$0xff] %vm377, %v1078
        %v1083 = vld [vmem:[#allocation2] sm:$0xff]
        %v1084 = vld [vmem:[#allocation2 + $0x8] sm:$0xff]
        %v1085 = vld [vmem:[#allocation2 + $0x10] sm:$0xff]
        %v1086 = vperm.slane %v349, 1
        %v1087 = vperm.slane %v350, 1
        %1090 = vrot.lane.b32.xlu0 %v1086, 113
        %v1091 = vpop.permute.xlu0 %1090
        %1092 = vrot.lane.b32.xlu0 %v1087, 113
        %v1093 = vpop.permute.xlu0 %1092
        %vm1094 = vcmask 924672
        %v1095 = vsel %vm1094, %v1091, %v1093
        %v1099 = vmul.f32 %v1083, %v1091
        %v1100 = vmul.f32 %v1084, %v1095
        %v1101 = vmul.f32 %v1085, %v1093
        %1105 = vrot.lane.b32.xlu0 %v1099, 15
        %v1106 = vpop.permute.xlu0 %1105
        %1107 = vrot.lane.b32.xlu0 %v1100, 15
        %v1108 = vpop.permute.xlu0 %1107
        %1109 = vrot.lane.b32.xlu0 %v1101, 15
        %v1110 = vpop.permute.xlu0 %1109
        %vm1111 = vcmask 121856
        %v1112 = vsel %vm1111, %v1106, %v1108
        %v1113 = vsel %vm1111, %v1108, %v1110
        %1116 = vst [vmem:[#allocation3 + $0x190] sm:$0xff] %v1112
        %1117 = vst.msk [vmem:[#allocation3 + $0x198] sm:$0xff] %vm377, %v1113
        %v1118 = vld [vmem:[#allocation2] sm:$0xff]
        %v1119 = vld [vmem:[#allocation2 + $0x8] sm:$0xff]
        %v1120 = vld [vmem:[#allocation2 + $0x10] sm:$0xff]
        %v1121 = vperm.slane %v349, 2
        %v1122 = vperm.slane %v350, 2
        %1125 = vrot.lane.b32.xlu0 %v1121, 114
        %v1126 = vpop.permute.xlu0 %1125
        %1127 = vrot.lane.b32.xlu0 %v1122, 114
        %v1128 = vpop.permute.xlu0 %1127
        %vm1129 = vcmask 932864
        %v1130 = vsel %vm1129, %v1126, %v1128
        %v1134 = vmul.f32 %v1118, %v1126
        %v1135 = vmul.f32 %v1119, %v1130
        %v1136 = vmul.f32 %v1120, %v1128
        %1140 = vrot.lane.b32.xlu0 %v1134, 14
        %v1141 = vpop.permute.xlu0 %1140
        %1142 = vrot.lane.b32.xlu0 %v1135, 14
        %v1143 = vpop.permute.xlu0 %1142
        %1144 = vrot.lane.b32.xlu0 %v1136, 14
        %v1145 = vpop.permute.xlu0 %1144
        %vm1146 = vcmask 113664
        %v1147 = vsel %vm1146, %v1141, %v1143
        %v1148 = vsel %vm1146, %v1143, %v1145
        %1151 = vst [vmem:[#allocation3 + $0x1a0] sm:$0xff] %v1147
        %1152 = vst.msk [vmem:[#allocation3 + $0x1a8] sm:$0xff] %vm377, %v1148
        %v1153 = vld [vmem:[%s2] sm:$0xff]
        %v1154 = vld [vmem:[%s2 + $0x8] sm:$0xff]
        %v1155 = vld [vmem:[#allocation3] sm:$0xff]
        %v1156 = vld [vmem:[#allocation3 + $0x8] sm:$0xff]
        %v1157 = vld [vmem:[#allocation3 + $0x10] sm:$0xff]
        %v1158 = vld [vmem:[#allocation3 + $0x18] sm:$0xff]
        %v1159 = vld [vmem:[#allocation3 + $0x20] sm:$0xff]
        %v1160 = vld [vmem:[#allocation3 + $0x28] sm:$0xff]
        %v1161 = vld [vmem:[#allocation3 + $0x30] sm:$0xff]
        %v1162 = vld [vmem:[#allocation3 + $0x38] sm:$0xff]
        %v1163 = vld [vmem:[#allocation3 + $0x40] sm:$0xff]
        %v1164 = vld [vmem:[#allocation3 + $0x48] sm:$0xff]
        %v1165 = vld [vmem:[#allocation3 + $0x50] sm:$0xff]
        %v1166 = vld [vmem:[#allocation3 + $0x58] sm:$0xff]
        %v1167 = vld [vmem:[#allocation3 + $0x60] sm:$0xff]
        %v1168 = vld [vmem:[#allocation3 + $0x68] sm:$0xff]
        %v1169 = vld [vmem:[#allocation3 + $0x70] sm:$0xff]
        %v1170 = vld [vmem:[#allocation3 + $0x78] sm:$0xff]
        %v1171 = vld [vmem:[#allocation3 + $0x80] sm:$0xff]
        %v1172 = vld [vmem:[#allocation3 + $0x88] sm:$0xff]
        %v1173 = vld [vmem:[#allocation3 + $0x90] sm:$0xff]
        %v1174 = vld [vmem:[#allocation3 + $0x98] sm:$0xff]
        %v1175 = vld [vmem:[#allocation3 + $0xa0] sm:$0xff]
        %v1176 = vld [vmem:[#allocation3 + $0xa8] sm:$0xff]
        %v1177 = vld [vmem:[#allocation3 + $0xb0] sm:$0xff]
        %v1178 = vld [vmem:[#allocation3 + $0xb8] sm:$0xff]
        %v1179 = vld [vmem:[#allocation3 + $0xc0] sm:$0xff]
        %v1180 = vld [vmem:[#allocation3 + $0xc8] sm:$0xff]
        %v1181 = vld [vmem:[#allocation3 + $0xd0] sm:$0xff]
        %v1182 = vld [vmem:[#allocation3 + $0xd8] sm:$0xff]
        %v1183 = vld [vmem:[#allocation3 + $0xe0] sm:$0xff]
        %v1184 = vld [vmem:[#allocation3 + $0xe8] sm:$0xff]
        %v1185 = vld [vmem:[#allocation3 + $0xf0] sm:$0xff]
        %v1186 = vld [vmem:[#allocation3 + $0xf8] sm:$0xff]
        %v1187 = vld [vmem:[#allocation3 + $0x100] sm:$0xff]
        %v1188 = vld [vmem:[#allocation3 + $0x108] sm:$0xff]
        %v1189 = vld [vmem:[#allocation3 + $0x110] sm:$0xff]
        %v1190 = vld [vmem:[#allocation3 + $0x118] sm:$0xff]
        %v1191 = vld [vmem:[#allocation3 + $0x120] sm:$0xff]
        %v1192 = vld [vmem:[#allocation3 + $0x128] sm:$0xff]
        %v1193 = vld [vmem:[#allocation3 + $0x130] sm:$0xff]
        %v1194 = vld [vmem:[#allocation3 + $0x138] sm:$0xff]
        %v1195 = vld [vmem:[#allocation3 + $0x140] sm:$0xff]
        %v1196 = vld [vmem:[#allocation3 + $0x148] sm:$0xff]
        %v1197 = vld [vmem:[#allocation3 + $0x150] sm:$0xff]
        %v1198 = vld [vmem:[#allocation3 + $0x158] sm:$0xff]
        %v1199 = vld [vmem:[#allocation3 + $0x160] sm:$0xff]
        %v1200 = vld [vmem:[#allocation3 + $0x168] sm:$0xff]
        %v1201 = vld [vmem:[#allocation3 + $0x170] sm:$0xff]
        %v1202 = vld [vmem:[#allocation3 + $0x178] sm:$0xff]
        %v1203 = vld [vmem:[#allocation3 + $0x180] sm:$0xff]
        %v1204 = vld [vmem:[#allocation3 + $0x188] sm:$0xff]
        %v1205 = vld [vmem:[#allocation3 + $0x190] sm:$0xff]
        %v1206 = vld [vmem:[#allocation3 + $0x198] sm:$0xff]
        %v1207 = vld [vmem:[#allocation3 + $0x1a0] sm:$0xff]
        %v1208 = vld [vmem:[#allocation3 + $0x1a8] sm:$0xff]
        %vm1209 = vcmask 719872
        %v1211 = vsel %vm1209, %v1154, 0
        %1213 = vmatpush.msra.mxu0 %v1185
        %1214 = vmatpush.msra.mxu0 %v1183
        %1215 = vmatpush.msra.mxu0 %v1181
        %1216 = vmatpush.msra.mxu0 %v1179
        %1217 = vmatpush.msra.mxu0 %v1177
        %1218 = vmatpush.msra.mxu0 %v1175
        %1219 = vmatpush.msra.mxu0 %v1173
        %1220 = vmatpush.msra.mxu0 %v1171
        %1221 = vmatpush.msra.mxu0 %v1169
        %1222 = vmatpush.msra.mxu0 %v1167
        %1223 = vmatpush.msra.mxu0 %v1165
        %1224 = vmatpush.msra.mxu0 %v1163
        %1225 = vmatpush.msra.mxu0 %v1161
        %1226 = vmatpush.msra.mxu0 %v1159
        %1227 = vmatpush.msra.mxu0 %v1157
        %1228 = vmatpush.msra.mxu0 %v1155
        %1229 = vmatmul.f32.gmra.mxu0 %v1153
        %v1230 = vpop.f32.mrf.mxu0
        %v1231 = vadd.f32 0.0, %v1230
        %1232 = vdwg.mxu0
        %1233 = vmatpush.msra.mxu0 0.0
        %1234 = vmatpush.msra.mxu0 0.0
        %1235 = vmatpush.msra.mxu0 0.0
        %1236 = vmatpush.msra.mxu0 0.0
        %1237 = vmatpush.msra.mxu0 0.0
        %1238 = vmatpush.msra.mxu0 %v1207
        %1239 = vmatpush.msra.mxu0 %v1205
        %1240 = vmatpush.msra.mxu0 %v1203
        %1241 = vmatpush.msra.mxu0 %v1201
        %1242 = vmatpush.msra.mxu0 %v1199
        %1243 = vmatpush.msra.mxu0 %v1197
        %1244 = vmatpush.msra.mxu0 %v1195
        %1245 = vmatpush.msra.mxu0 %v1193
        %1246 = vmatpush.msra.mxu0 %v1191
        %1247 = vmatpush.msra.mxu0 %v1189
        %1248 = vmatpush.msra.mxu0 %v1187
        %1249 = vmatmul.f32.gmra.mxu0 %v1211
        %v1250 = vpop.f32.mrf.mxu0
        %v1251 = vadd.f32 %v1231, %v1250
        %1252 = vdwg.mxu0
        %1253 = vmatpush.msra.mxu0 %v1186
        %1254 = vmatpush.msra.mxu0 %v1184
        %1255 = vmatpush.msra.mxu0 %v1182
        %1256 = vmatpush.msra.mxu0 %v1180
        %1257 = vmatpush.msra.mxu0 %v1178
        %1258 = vmatpush.msra.mxu0 %v1176
        %1259 = vmatpush.msra.mxu0 %v1174
        %1260 = vmatpush.msra.mxu0 %v1172
        %1261 = vmatpush.msra.mxu0 %v1170
        %1262 = vmatpush.msra.mxu0 %v1168
        %1263 = vmatpush.msra.mxu0 %v1166
        %1264 = vmatpush.msra.mxu0 %v1164
        %1265 = vmatpush.msra.mxu0 %v1162
        %1266 = vmatpush.msra.mxu0 %v1160
        %1267 = vmatpush.msra.mxu0 %v1158
        %1268 = vmatpush.msra.mxu0 %v1156
        %1269 = vmatmul.f32.gmra.mxu0 %v1153
        %v1270 = vpop.f32.mrf.mxu0
        %v1271 = vadd.f32 0.0, %v1270
        %1272 = vdwg.mxu0
        %1273 = vmatpush.msra.mxu0 0.0
        %1274 = vmatpush.msra.mxu0 0.0
        %1275 = vmatpush.msra.mxu0 0.0
        %1276 = vmatpush.msra.mxu0 0.0
        %1277 = vmatpush.msra.mxu0 0.0
        %1278 = vmatpush.msra.mxu0 %v1208
        %1279 = vmatpush.msra.mxu0 %v1206
        %1280 = vmatpush.msra.mxu0 %v1204
        %1281 = vmatpush.msra.mxu0 %v1202
        %1282 = vmatpush.msra.mxu0 %v1200
        %1283 = vmatpush.msra.mxu0 %v1198
        %1284 = vmatpush.msra.mxu0 %v1196
        %1285 = vmatpush.msra.mxu0 %v1194
        %1286 = vmatpush.msra.mxu0 %v1192
        %1287 = vmatpush.msra.mxu0 %v1190
        %1288 = vmatpush.msra.mxu0 %v1188
        %1289 = vmatmul.f32.gmra.mxu0 %v1211
        %v1290 = vpop.f32.mrf.mxu0
        %v1291 = vadd.f32 %v1271, %v1290
        %1292 = vdwg.mxu0
        %v1293 = vld [vmem:[%s3] sm:$0xff]
        %1295 = vset.pattern.permute.xlu0 0
        %1296 = vperm.xlu0 %1295, %v1293
        %v1297 = vpop.permute.xlu0 %1296
        %v1299 = vmul.f32 %v1251, %v1297
        %v1300 = vmul.f32 %v1291, %v1297
        %v1301 = vld [vmem:[%s4] sm:$0xff]
        %1303 = vset.pattern.permute.xlu0 0
        %1304 = vperm.xlu0 %1303, %v1301
        %v1305 = vpop.permute.xlu0 %1304
        %v1307 = vadd.f32 %v1299, %v1305
        %v1308 = vadd.f32 %v1300, %v1305
        %v1309 = vmax.f32 %v1307, 0.0
        %v1310 = vmax.f32 %v1308, 0.0
        %1313 = vrot.lane.b32.xlu0 %v1309, 57
        %v1314 = vpop.permute.xlu0 %1313
        %1315 = vrot.lane.b32.xlu0 %v1310, 57
        %v1316 = vpop.permute.xlu0 %1315
        %v1317 = vsel %vm351, %v1314, %v1316
        %1320 = vst.msk [vmem:[#allocation2] sm:$0xff] %vm366, %v1314
        %1321 = vst.msk [vmem:[#allocation2 + $0x8] sm:$0xff] %vm368, %v1317
        %v1322 = vld [vmem:[#allocation2] sm:$0xff]
        %v1323 = vld [vmem:[#allocation2 + $0x8] sm:$0xff]
        %v1324 = vmul.f32 %v1322, %v372
        %v1325 = vmul.f32 %v1323, %v373
        %1326 = vst [vmem:[#allocation3] sm:$0xff] %v1324
        %1327 = vst.msk [vmem:[#allocation3 + $0x8] sm:$0xff] %vm377, %v1325
        %v1328 = vld [vmem:[#allocation2] sm:$0xff]
        %v1329 = vld [vmem:[#allocation2 + $0x8] sm:$0xff]
        %v1330 = vmul.f32 %v1328, %v386
        %v1331 = vmul.f32 %v1329, %v390
        %1334 = vrot.lane.b32.xlu0 %v1330, 127
        %v1335 = vpop.permute.xlu0 %1334
        %1336 = vrot.lane.b32.xlu0 %v1331, 127
        %v1337 = vpop.permute.xlu0 %1336
        %v1338 = vsel %vm401, %v1335, %v1337
        %1341 = vst [vmem:[#allocation3 + $0x10] sm:$0xff] %v1338
        %1342 = vst.msk [vmem:[#allocation3 + $0x18] sm:$0xff] %vm377, %v1337
        %v1343 = vld [vmem:[#allocation2] sm:$0xff]
        %v1344 = vld [vmem:[#allocation2 + $0x8] sm:$0xff]
        %v1345 = vmul.f32 %v1343, %v414
        %v1346 = vmul.f32 %v1344, %v418
        %1349 = vrot.lane.b32.xlu0 %v1345, 126
        %v1350 = vpop.permute.xlu0 %1349
        %1351 = vrot.lane.b32.xlu0 %v1346, 126
        %v1352 = vpop.permute.xlu0 %1351
        %v1353 = vsel %vm429, %v1350, %v1352
        %1356 = vst [vmem:[#allocation3 + $0x20] sm:$0xff] %v1353
        %1357 = vst.msk [vmem:[#allocation3 + $0x28] sm:$0xff] %vm377, %v1352
        %v1358 = vld [vmem:[#allocation2] sm:$0xff]
        %v1359 = vld [vmem:[#allocation2 + $0x8] sm:$0xff]
        %v1360 = vmul.f32 %v1358, %v442
        %v1361 = vmul.f32 %v1359, %v446
        %1364 = vrot.lane.b32.xlu0 %v1360, 120
        %v1365 = vpop.permute.xlu0 %1364
        %1366 = vrot.lane.b32.xlu0 %v1361, 120
        %v1367 = vpop.permute.xlu0 %1366
        %v1368 = vsel %vm457, %v1365, %v1367
        %1371 = vst [vmem:[#allocation3 + $0x30] sm:$0xff] %v1368
        %1372 = vst.msk [vmem:[#allocation3 + $0x38] sm:$0xff] %vm377, %v1367
        %v1373 = vld [vmem:[#allocation2] sm:$0xff]
        %v1374 = vld [vmem:[#allocation2 + $0x8] sm:$0xff]
        %v1375 = vmul.f32 %v1373, %v470
        %v1376 = vmul.f32 %v1374, %v474
        %1379 = vrot.lane.b32.xlu0 %v1375, 119
        %v1380 = vpop.permute.xlu0 %1379
        %1381 = vrot.lane.b32.xlu0 %v1376, 119
        %v1382 = vpop.permute.xlu0 %1381
        %v1383 = vsel %vm485, %v1380, %v1382
        %1386 = vst [vmem:[#allocation3 + $0x40] sm:$0xff] %v1383
        %1387 = vst.msk [vmem:[#allocation3 + $0x48] sm:$0xff] %vm377, %v1382
        %v1388 = vld [vmem:[#allocation2] sm:$0xff]
        %v1389 = vld [vmem:[#allocation2 + $0x8] sm:$0xff]
        %v1390 = vmul.f32 %v1388, %v498
        %v1391 = vmul.f32 %v1389, %v502
        %1394 = vrot.lane.b32.xlu0 %v1390, 118
        %v1395 = vpop.permute.xlu0 %1394
        %1396 = vrot.lane.b32.xlu0 %v1391, 118
        %v1397 = vpop.permute.xlu0 %1396
        %v1398 = vsel %vm513, %v1395, %v1397
        %1401 = vst [vmem:[#allocation3 + $0x50] sm:$0xff] %v1398
        %1402 = vst.msk [vmem:[#allocation3 + $0x58] sm:$0xff] %vm377, %v1397
        %v1403 = vld [vmem:[#allocation2] sm:$0xff]
        %v1404 = vld [vmem:[#allocation2 + $0x8] sm:$0xff]
        %v1405 = vmul.f32 %v1403, %v526
        %v1406 = vmul.f32 %v1404, %v530
        %1409 = vrot.lane.b32.xlu0 %v1405, 112
        %v1410 = vpop.permute.xlu0 %1409
        %1411 = vrot.lane.b32.xlu0 %v1406, 112
        %v1412 = vpop.permute.xlu0 %1411
        %v1413 = vsel %vm541, %v1410, %v1412
        %1416 = vst [vmem:[#allocation3 + $0x60] sm:$0xff] %v1413
        %1417 = vst.msk [vmem:[#allocation3 + $0x68] sm:$0xff] %vm377, %v1412
        %v1418 = vld [vmem:[#allocation2] sm:$0xff]
        %v1419 = vld [vmem:[#allocation2 + $0x8] sm:$0xff]
        %v1420 = vmul.f32 %v1418, %v554
        %v1421 = vmul.f32 %v1419, %v558
        %1424 = vrot.lane.b32.xlu0 %v1420, 111
        %v1425 = vpop.permute.xlu0 %1424
        %1426 = vrot.lane.b32.xlu0 %v1421, 111
        %v1427 = vpop.permute.xlu0 %1426
        %v1428 = vsel %vm569, %v1425, %v1427
        %1431 = vst [vmem:[#allocation3 + $0x70] sm:$0xff] %v1428
        %1432 = vst.msk [vmem:[#allocation3 + $0x78] sm:$0xff] %vm377, %v1427
        %v1433 = vld [vmem:[#allocation2] sm:$0xff]
        %v1434 = vld [vmem:[#allocation2 + $0x8] sm:$0xff]
        %v1435 = vmul.f32 %v1433, %v582
        %v1436 = vmul.f32 %v1434, %v586
        %1439 = vrot.lane.b32.xlu0 %v1435, 110
        %v1440 = vpop.permute.xlu0 %1439
        %1441 = vrot.lane.b32.xlu0 %v1436, 110
        %v1442 = vpop.permute.xlu0 %1441
        %v1443 = vsel %vm597, %v1440, %v1442
        %1446 = vst [vmem:[#allocation3 + $0x80] sm:$0xff] %v1443
        %1447 = vst.msk [vmem:[#allocation3 + $0x88] sm:$0xff] %vm377, %v1442
        %v1448 = vld [vmem:[#allocation2] sm:$0xff]
        %v1449 = vld [vmem:[#allocation2 + $0x8] sm:$0xff]
        %v1450 = vmul.f32 %v1448, %v610
        %v1451 = vmul.f32 %v1449, %v614
        %1454 = vrot.lane.b32.xlu0 %v1450, 80
        %v1455 = vpop.permute.xlu0 %1454
        %1456 = vrot.lane.b32.xlu0 %v1451, 80
        %v1457 = vpop.permute.xlu0 %1456
        %v1458 = vsel %vm625, %v1455, %v1457
        %1461 = vst [vmem:[#allocation3 + $0x90] sm:$0xff] %v1458
        %1462 = vst.msk [vmem:[#allocation3 + $0x98] sm:$0xff] %vm377, %v1457
        %v1463 = vld [vmem:[#allocation2] sm:$0xff]
        %v1464 = vld [vmem:[#allocation2 + $0x8] sm:$0xff]
        %v1465 = vmul.f32 %v1463, %v638
        %v1466 = vmul.f32 %v1464, %v642
        %1469 = vrot.lane.b32.xlu0 %v1465, 79
        %v1470 = vpop.permute.xlu0 %1469
        %1471 = vrot.lane.b32.xlu0 %v1466, 79
        %v1472 = vpop.permute.xlu0 %1471
        %v1473 = vsel %vm653, %v1470, %v1472
        %1476 = vst [vmem:[#allocation3 + $0xa0] sm:$0xff] %v1473
        %1477 = vst.msk [vmem:[#allocation3 + $0xa8] sm:$0xff] %vm377, %v1472
        %v1478 = vld [vmem:[#allocation2] sm:$0xff]
        %v1479 = vld [vmem:[#allocation2 + $0x8] sm:$0xff]
        %v1480 = vmul.f32 %v1478, %v666
        %v1481 = vmul.f32 %v1479, %v669
        %1484 = vrot.lane.b32.xlu0 %v1480, 78
        %v1485 = vpop.permute.xlu0 %1484
        %1486 = vrot.lane.b32.xlu0 %v1481, 78
        %v1487 = vpop.permute.xlu0 %1486
        %v1488 = vsel %vm680, %v1485, %v1487
        %1491 = vst [vmem:[#allocation3 + $0xb0] sm:$0xff] %v1488
        %1492 = vst.msk [vmem:[#allocation3 + $0xb8] sm:$0xff] %vm377, %v1487
        %v1493 = vld [vmem:[#allocation2] sm:$0xff]
        %v1494 = vld [vmem:[#allocation2 + $0x8] sm:$0xff]
        %v1495 = vmul.f32 %v1493, %v693
        %v1496 = vmul.f32 %v1494, %v697
        %1499 = vrot.lane.b32.xlu0 %v1495, 72
        %v1500 = vpop.permute.xlu0 %1499
        %1501 = vrot.lane.b32.xlu0 %v1496, 72
        %v1502 = vpop.permute.xlu0 %1501
        %v1503 = vsel %vm708, %v1500, %v1502
        %1506 = vst [vmem:[#allocation3 + $0xc0] sm:$0xff] %v1503
        %1507 = vst.msk [vmem:[#allocation3 + $0xc8] sm:$0xff] %vm377, %v1502
        %1508 = vst [vmem:[#allocation3 + $0xd0] sm:$0xff] %v1309
        %1509 = vst.msk [vmem:[#allocation3 + $0xd8] sm:$0xff] %vm377, %v1310
        %v1510 = vld [vmem:[#allocation2] sm:$0xff]
        %v1511 = vld [vmem:[#allocation2 + $0x8] sm:$0xff]
        %v1512 = vmul.f32 %v1510, %v723
        %v1513 = vmul.f32 %v1511, %v727
        %1516 = vrot.lane.b32.xlu0 %v1512, 70
        %v1517 = vpop.permute.xlu0 %1516
        %1518 = vrot.lane.b32.xlu0 %v1513, 70
        %v1519 = vpop.permute.xlu0 %1518
        %v1520 = vsel %vm738, %v1517, %v1519
        %1523 = vst [vmem:[#allocation3 + $0xe0] sm:$0xff] %v1520
        %1524 = vst.msk [vmem:[#allocation3 + $0xe8] sm:$0xff] %vm377, %v1519
        %v1525 = vld [vmem:[#allocation2] sm:$0xff]
        %v1526 = vld [vmem:[#allocation2 + $0x8] sm:$0xff]
        %v1527 = vmul.f32 %v1525, %v751
        %v1528 = vmul.f32 %v1526, %v754
        %1531 = vrot.lane.b32.xlu0 %v1527, 64
        %v1532 = vpop.permute.xlu0 %1531
        %1533 = vrot.lane.b32.xlu0 %v1528, 64
        %v1534 = vpop.permute.xlu0 %1533
        %v1535 = vsel %vm377, %v1532, %v1534
        %1538 = vst [vmem:[#allocation3 + $0xf0] sm:$0xff] %v1535
        %1539 = vst.msk [vmem:[#allocation3 + $0xf8] sm:$0xff] %vm377, %v1534
        %v1540 = vld [vmem:[#allocation2] sm:$0xff]
        %v1541 = vld [vmem:[#allocation2 + $0x8] sm:$0xff]
        %v1542 = vld [vmem:[#allocation2 + $0x10] sm:$0xff]
        %v1543 = vmul.f32 %v1540, %v778
        %v1544 = vmul.f32 %v1541, %v782
        %v1545 = vmul.f32 %v1542, %v780
        %1549 = vrot.lane.b32.xlu0 %v1543, 63
        %v1550 = vpop.permute.xlu0 %1549
        %1551 = vrot.lane.b32.xlu0 %v1544, 63
        %v1552 = vpop.permute.xlu0 %1551
        %1553 = vrot.lane.b32.xlu0 %v1545, 63
        %v1554 = vpop.permute.xlu0 %1553
        %v1555 = vsel %vm798, %v1550, %v1552
        %v1556 = vsel %vm798, %v1552, %v1554
        %1559 = vst [vmem:[#allocation3 + $0x100] sm:$0xff] %v1555
        %1560 = vst.msk [vmem:[#allocation3 + $0x108] sm:$0xff] %vm377, %v1556
        %v1561 = vld [vmem:[#allocation2] sm:$0xff]
        %v1562 = vld [vmem:[#allocation2 + $0x8] sm:$0xff]
        %v1563 = vld [vmem:[#allocation2 + $0x10] sm:$0xff]
        %v1564 = vmul.f32 %v1561, %v813
        %v1565 = vmul.f32 %v1562, %v817
        %v1566 = vmul.f32 %v1563, %v815
        %1570 = vrot.lane.b32.xlu0 %v1564, 62
        %v1571 = vpop.permute.xlu0 %1570
        %1572 = vrot.lane.b32.xlu0 %v1565, 62
        %v1573 = vpop.permute.xlu0 %1572
        %1574 = vrot.lane.b32.xlu0 %v1566, 62
        %v1575 = vpop.permute.xlu0 %1574
        %v1576 = vsel %vm833, %v1571, %v1573
        %v1577 = vsel %vm833, %v1573, %v1575
        %1580 = vst [vmem:[#allocation3 + $0x110] sm:$0xff] %v1576
        %1581 = vst.msk [vmem:[#allocation3 + $0x118] sm:$0xff] %vm377, %v1577
        %v1582 = vld [vmem:[#allocation2] sm:$0xff]
        %v1583 = vld [vmem:[#allocation2 + $0x8] sm:$0xff]
        %v1584 = vld [vmem:[#allocation2 + $0x10] sm:$0xff]
        %v1585 = vmul.f32 %v1582, %v848
        %v1586 = vmul.f32 %v1583, %v852
        %v1587 = vmul.f32 %v1584, %v850
        %1591 = vrot.lane.b32.xlu0 %v1585, 32
        %v1592 = vpop.permute.xlu0 %1591
        %1593 = vrot.lane.b32.xlu0 %v1586, 32
        %v1594 = vpop.permute.xlu0 %1593
        %1595 = vrot.lane.b32.xlu0 %v1587, 32
        %v1596 = vpop.permute.xlu0 %1595
        %v1597 = vsel %vm868, %v1592, %v1594
        %v1598 = vsel %vm868, %v1594, %v1596
        %1601 = vst [vmem:[#allocation3 + $0x120] sm:$0xff] %v1597
        %1602 = vst.msk [vmem:[#allocation3 + $0x128] sm:$0xff] %vm377, %v1598
        %v1603 = vld [vmem:[#allocation2] sm:$0xff]
        %v1604 = vld [vmem:[#allocation2 + $0x8] sm:$0xff]
        %v1605 = vld [vmem:[#allocation2 + $0x10] sm:$0xff]
        %v1606 = vmul.f32 %v1603, %v883
        %v1607 = vmul.f32 %v1604, %v887
        %v1608 = vmul.f32 %v1605, %v885
        %1612 = vrot.lane.b32.xlu0 %v1606, 31
        %v1613 = vpop.permute.xlu0 %1612
        %1614 = vrot.lane.b32.xlu0 %v1607, 31
        %v1615 = vpop.permute.xlu0 %1614
        %1616 = vrot.lane.b32.xlu0 %v1608, 31
        %v1617 = vpop.permute.xlu0 %1616
        %v1618 = vsel %vm903, %v1613, %v1615
        %v1619 = vsel %vm903, %v1615, %v1617
        %1622 = vst [vmem:[#allocation3 + $0x130] sm:$0xff] %v1618
        %1623 = vst.msk [vmem:[#allocation3 + $0x138] sm:$0xff] %vm377, %v1619
        %v1624 = vld [vmem:[#allocation2] sm:$0xff]
        %v1625 = vld [vmem:[#allocation2 + $0x8] sm:$0xff]
        %v1626 = vld [vmem:[#allocation2 + $0x10] sm:$0xff]
        %v1627 = vmul.f32 %v1624, %v918
        %v1628 = vmul.f32 %v1625, %v922
        %v1629 = vmul.f32 %v1626, %v920
        %1633 = vrot.lane.b32.xlu0 %v1627, 30
        %v1634 = vpop.permute.xlu0 %1633
        %1635 = vrot.lane.b32.xlu0 %v1628, 30
        %v1636 = vpop.permute.xlu0 %1635
        %1637 = vrot.lane.b32.xlu0 %v1629, 30
        %v1638 = vpop.permute.xlu0 %1637
        %v1639 = vsel %vm938, %v1634, %v1636
        %v1640 = vsel %vm938, %v1636, %v1638
        %1643 = vst [vmem:[#allocation3 + $0x140] sm:$0xff] %v1639
        %1644 = vst.msk [vmem:[#allocation3 + $0x148] sm:$0xff] %vm377, %v1640
        %v1645 = vld [vmem:[#allocation2] sm:$0xff]
        %v1646 = vld [vmem:[#allocation2 + $0x8] sm:$0xff]
        %v1647 = vld [vmem:[#allocation2 + $0x10] sm:$0xff]
        %v1648 = vmul.f32 %v1645, %v953
        %v1649 = vmul.f32 %v1646, %v957
        %v1650 = vmul.f32 %v1647, %v955
        %1654 = vrot.lane.b32.xlu0 %v1648, 24
        %v1655 = vpop.permute.xlu0 %1654
        %1656 = vrot.lane.b32.xlu0 %v1649, 24
        %v1657 = vpop.permute.xlu0 %1656
        %1658 = vrot.lane.b32.xlu0 %v1650, 24
        %v1659 = vpop.permute.xlu0 %1658
        %v1660 = vsel %vm973, %v1655, %v1657
        %v1661 = vsel %vm973, %v1657, %v1659
        %1664 = vst [vmem:[#allocation3 + $0x150] sm:$0xff] %v1660
        %1665 = vst.msk [vmem:[#allocation3 + $0x158] sm:$0xff] %vm377, %v1661
        %v1666 = vld [vmem:[#allocation2] sm:$0xff]
        %v1667 = vld [vmem:[#allocation2 + $0x8] sm:$0xff]
        %v1668 = vld [vmem:[#allocation2 + $0x10] sm:$0xff]
        %v1669 = vmul.f32 %v1666, %v988
        %v1670 = vmul.f32 %v1667, %v992
        %v1671 = vmul.f32 %v1668, %v990
        %1675 = vrot.lane.b32.xlu0 %v1669, 23
        %v1676 = vpop.permute.xlu0 %1675
        %1677 = vrot.lane.b32.xlu0 %v1670, 23
        %v1678 = vpop.permute.xlu0 %1677
        %1679 = vrot.lane.b32.xlu0 %v1671, 23
        %v1680 = vpop.permute.xlu0 %1679
        %v1681 = vsel %vm1008, %v1676, %v1678
        %v1682 = vsel %vm1008, %v1678, %v1680
        %1685 = vst [vmem:[#allocation3 + $0x160] sm:$0xff] %v1681
        %1686 = vst.msk [vmem:[#allocation3 + $0x168] sm:$0xff] %vm377, %v1682
        %v1687 = vld [vmem:[#allocation2] sm:$0xff]
        %v1688 = vld [vmem:[#allocation2 + $0x8] sm:$0xff]
        %v1689 = vld [vmem:[#allocation2 + $0x10] sm:$0xff]
        %v1690 = vmul.f32 %v1687, %v1023
        %v1691 = vmul.f32 %v1688, %v1027
        %v1692 = vmul.f32 %v1689, %v1025
        %1696 = vrot.lane.b32.xlu0 %v1690, 22
        %v1697 = vpop.permute.xlu0 %1696
        %1698 = vrot.lane.b32.xlu0 %v1691, 22
        %v1699 = vpop.permute.xlu0 %1698
        %1700 = vrot.lane.b32.xlu0 %v1692, 22
        %v1701 = vpop.permute.xlu0 %1700
        %v1702 = vsel %vm1043, %v1697, %v1699
        %v1703 = vsel %vm1043, %v1699, %v1701
        %1706 = vst [vmem:[#allocation3 + $0x170] sm:$0xff] %v1702
        %1707 = vst.msk [vmem:[#allocation3 + $0x178] sm:$0xff] %vm377, %v1703
        %v1708 = vld [vmem:[#allocation2] sm:$0xff]
        %v1709 = vld [vmem:[#allocation2 + $0x8] sm:$0xff]
        %v1710 = vld [vmem:[#allocation2 + $0x10] sm:$0xff]
        %v1711 = vmul.f32 %v1708, %v1058
        %v1712 = vmul.f32 %v1709, %v1061
        %v1713 = vmul.f32 %v1710, %v1060
        %1717 = vrot.lane.b32.xlu0 %v1711, 16
        %v1718 = vpop.permute.xlu0 %1717
        %1719 = vrot.lane.b32.xlu0 %v1712, 16
        %v1720 = vpop.permute.xlu0 %1719
        %1721 = vrot.lane.b32.xlu0 %v1713, 16
        %v1722 = vpop.permute.xlu0 %1721
        %v1723 = vsel %vm529, %v1718, %v1720
        %v1724 = vsel %vm529, %v1720, %v1722
        %1727 = vst [vmem:[#allocation3 + $0x180] sm:$0xff] %v1723
        %1728 = vst.msk [vmem:[#allocation3 + $0x188] sm:$0xff] %vm377, %v1724
        %v1729 = vld [vmem:[#allocation2] sm:$0xff]
        %v1730 = vld [vmem:[#allocation2 + $0x8] sm:$0xff]
        %v1731 = vld [vmem:[#allocation2 + $0x10] sm:$0xff]
        %v1732 = vmul.f32 %v1729, %v1091
        %v1733 = vmul.f32 %v1730, %v1095
        %v1734 = vmul.f32 %v1731, %v1093
        %1738 = vrot.lane.b32.xlu0 %v1732, 15
        %v1739 = vpop.permute.xlu0 %1738
        %1740 = vrot.lane.b32.xlu0 %v1733, 15
        %v1741 = vpop.permute.xlu0 %1740
        %1742 = vrot.lane.b32.xlu0 %v1734, 15
        %v1743 = vpop.permute.xlu0 %1742
        %v1744 = vsel %vm1111, %v1739, %v1741
        %v1745 = vsel %vm1111, %v1741, %v1743
        %1748 = vst [vmem:[#allocation3 + $0x190] sm:$0xff] %v1744
        %1749 = vst.msk [vmem:[#allocation3 + $0x198] sm:$0xff] %vm377, %v1745
        %v1750 = vld [vmem:[#allocation2] sm:$0xff]
        %v1751 = vld [vmem:[#allocation2 + $0x8] sm:$0xff]
        %v1752 = vld [vmem:[#allocation2 + $0x10] sm:$0xff]
        %v1753 = vmul.f32 %v1750, %v1126
        %v1754 = vmul.f32 %v1751, %v1130
        %v1755 = vmul.f32 %v1752, %v1128
        %1759 = vrot.lane.b32.xlu0 %v1753, 14
        %v1760 = vpop.permute.xlu0 %1759
        %1761 = vrot.lane.b32.xlu0 %v1754, 14
        %v1762 = vpop.permute.xlu0 %1761
        %1763 = vrot.lane.b32.xlu0 %v1755, 14
        %v1764 = vpop.permute.xlu0 %1763
        %v1765 = vsel %vm1146, %v1760, %v1762
        %v1766 = vsel %vm1146, %v1762, %v1764
        %1769 = vst [vmem:[#allocation3 + $0x1a0] sm:$0xff] %v1765
        %1770 = vst.msk [vmem:[#allocation3 + $0x1a8] sm:$0xff] %vm377, %v1766
        %v1771 = vld [vmem:[%s5] sm:$0xff]
        %v1772 = vld [vmem:[%s5 + $0x8] sm:$0xff]
        %v1773 = vld [vmem:[#allocation3] sm:$0xff]
        %v1774 = vld [vmem:[#allocation3 + $0x8] sm:$0xff]
        %v1775 = vld [vmem:[#allocation3 + $0x10] sm:$0xff]
        %v1776 = vld [vmem:[#allocation3 + $0x18] sm:$0xff]
        %v1777 = vld [vmem:[#allocation3 + $0x20] sm:$0xff]
        %v1778 = vld [vmem:[#allocation3 + $0x28] sm:$0xff]
        %v1779 = vld [vmem:[#allocation3 + $0x30] sm:$0xff]
        %v1780 = vld [vmem:[#allocation3 + $0x38] sm:$0xff]
        %v1781 = vld [vmem:[#allocation3 + $0x40] sm:$0xff]
        %v1782 = vld [vmem:[#allocation3 + $0x48] sm:$0xff]
        %v1783 = vld [vmem:[#allocation3 + $0x50] sm:$0xff]
        %v1784 = vld [vmem:[#allocation3 + $0x58] sm:$0xff]
        %v1785 = vld [vmem:[#allocation3 + $0x60] sm:$0xff]
        %v1786 = vld [vmem:[#allocation3 + $0x68] sm:$0xff]
        %v1787 = vld [vmem:[#allocation3 + $0x70] sm:$0xff]
        %v1788 = vld [vmem:[#allocation3 + $0x78] sm:$0xff]
        %v1789 = vld [vmem:[#allocation3 + $0x80] sm:$0xff]
        %v1790 = vld [vmem:[#allocation3 + $0x88] sm:$0xff]
        %v1791 = vld [vmem:[#allocation3 + $0x90] sm:$0xff]
        %v1792 = vld [vmem:[#allocation3 + $0x98] sm:$0xff]
        %v1793 = vld [vmem:[#allocation3 + $0xa0] sm:$0xff]
        %v1794 = vld [vmem:[#allocation3 + $0xa8] sm:$0xff]
        %v1795 = vld [vmem:[#allocation3 + $0xb0] sm:$0xff]
        %v1796 = vld [vmem:[#allocation3 + $0xb8] sm:$0xff]
        %v1797 = vld [vmem:[#allocation3 + $0xc0] sm:$0xff]
        %v1798 = vld [vmem:[#allocation3 + $0xc8] sm:$0xff]
        %v1799 = vld [vmem:[#allocation3 + $0xd0] sm:$0xff]
        %v1800 = vld [vmem:[#allocation3 + $0xd8] sm:$0xff]
        %v1801 = vld [vmem:[#allocation3 + $0xe0] sm:$0xff]
        %v1802 = vld [vmem:[#allocation3 + $0xe8] sm:$0xff]
        %v1803 = vld [vmem:[#allocation3 + $0xf0] sm:$0xff]
        %v1804 = vld [vmem:[#allocation3 + $0xf8] sm:$0xff]
        %v1805 = vld [vmem:[#allocation3 + $0x100] sm:$0xff]
        %v1806 = vld [vmem:[#allocation3 + $0x108] sm:$0xff]
        %v1807 = vld [vmem:[#allocation3 + $0x110] sm:$0xff]
        %v1808 = vld [vmem:[#allocation3 + $0x118] sm:$0xff]
        %v1809 = vld [vmem:[#allocation3 + $0x120] sm:$0xff]
        %v1810 = vld [vmem:[#allocation3 + $0x128] sm:$0xff]
        %v1811 = vld [vmem:[#allocation3 + $0x130] sm:$0xff]
        %v1812 = vld [vmem:[#allocation3 + $0x138] sm:$0xff]
        %v1813 = vld [vmem:[#allocation3 + $0x140] sm:$0xff]
        %v1814 = vld [vmem:[#allocation3 + $0x148] sm:$0xff]
        %v1815 = vld [vmem:[#allocation3 + $0x150] sm:$0xff]
        %v1816 = vld [vmem:[#allocation3 + $0x158] sm:$0xff]
        %v1817 = vld [vmem:[#allocation3 + $0x160] sm:$0xff]
        %v1818 = vld [vmem:[#allocation3 + $0x168] sm:$0xff]
        %v1819 = vld [vmem:[#allocation3 + $0x170] sm:$0xff]
        %v1820 = vld [vmem:[#allocation3 + $0x178] sm:$0xff]
        %v1821 = vld [vmem:[#allocation3 + $0x180] sm:$0xff]
        %v1822 = vld [vmem:[#allocation3 + $0x188] sm:$0xff]
        %v1823 = vld [vmem:[#allocation3 + $0x190] sm:$0xff]
        %v1824 = vld [vmem:[#allocation3 + $0x198] sm:$0xff]
        %v1825 = vld [vmem:[#allocation3 + $0x1a0] sm:$0xff]
        %v1826 = vld [vmem:[#allocation3 + $0x1a8] sm:$0xff]
        %v1828 = vsel %vm1209, %v1772, 0
        %1830 = vmatpush.msra.mxu0 %v1803
        %1831 = vmatpush.msra.mxu0 %v1801
        %1832 = vmatpush.msra.mxu0 %v1799
        %1833 = vmatpush.msra.mxu0 %v1797
        %1834 = vmatpush.msra.mxu0 %v1795
        %1835 = vmatpush.msra.mxu0 %v1793
        %1836 = vmatpush.msra.mxu0 %v1791
        %1837 = vmatpush.msra.mxu0 %v1789
        %1838 = vmatpush.msra.mxu0 %v1787
        %1839 = vmatpush.msra.mxu0 %v1785
        %1840 = vmatpush.msra.mxu0 %v1783
        %1841 = vmatpush.msra.mxu0 %v1781
        %1842 = vmatpush.msra.mxu0 %v1779
        %1843 = vmatpush.msra.mxu0 %v1777
        %1844 = vmatpush.msra.mxu0 %v1775
        %1845 = vmatpush.msra.mxu0 %v1773
        %1846 = vmatmul.f32.gmra.mxu0 %v1771
        %v1847 = vpop.f32.mrf.mxu0
        %v1848 = vadd.f32 0.0, %v1847
        %1849 = vdwg.mxu0
        %1850 = vmatpush.msra.mxu0 0.0
        %1851 = vmatpush.msra.mxu0 0.0
        %1852 = vmatpush.msra.mxu0 0.0
        %1853 = vmatpush.msra.mxu0 0.0
        %1854 = vmatpush.msra.mxu0 0.0
        %1855 = vmatpush.msra.mxu0 %v1825
        %1856 = vmatpush.msra.mxu0 %v1823
        %1857 = vmatpush.msra.mxu0 %v1821
        %1858 = vmatpush.msra.mxu0 %v1819
        %1859 = vmatpush.msra.mxu0 %v1817
        %1860 = vmatpush.msra.mxu0 %v1815
        %1861 = vmatpush.msra.mxu0 %v1813
        %1862 = vmatpush.msra.mxu0 %v1811
        %1863 = vmatpush.msra.mxu0 %v1809
        %1864 = vmatpush.msra.mxu0 %v1807
        %1865 = vmatpush.msra.mxu0 %v1805
        %1866 = vmatmul.f32.gmra.mxu0 %v1828
        %v1867 = vpop.f32.mrf.mxu0
        %v1868 = vadd.f32 %v1848, %v1867
        %1869 = vdwg.mxu0
        %1870 = vmatpush.msra.mxu0 %v1804
        %1871 = vmatpush.msra.mxu0 %v1802
        %1872 = vmatpush.msra.mxu0 %v1800
        %1873 = vmatpush.msra.mxu0 %v1798
        %1874 = vmatpush.msra.mxu0 %v1796
        %1875 = vmatpush.msra.mxu0 %v1794
        %1876 = vmatpush.msra.mxu0 %v1792
        %1877 = vmatpush.msra.mxu0 %v1790
        %1878 = vmatpush.msra.mxu0 %v1788
        %1879 = vmatpush.msra.mxu0 %v1786
        %1880 = vmatpush.msra.mxu0 %v1784
        %1881 = vmatpush.msra.mxu0 %v1782
        %1882 = vmatpush.msra.mxu0 %v1780
        %1883 = vmatpush.msra.mxu0 %v1778
        %1884 = vmatpush.msra.mxu0 %v1776
        %1885 = vmatpush.msra.mxu0 %v1774
        %1886 = vmatmul.f32.gmra.mxu0 %v1771
        %v1887 = vpop.f32.mrf.mxu0
        %v1888 = vadd.f32 0.0, %v1887
        %1889 = vdwg.mxu0
        %1890 = vmatpush.msra.mxu0 0.0
        %1891 = vmatpush.msra.mxu0 0.0
        %1892 = vmatpush.msra.mxu0 0.0
        %1893 = vmatpush.msra.mxu0 0.0
        %1894 = vmatpush.msra.mxu0 0.0
        %1895 = vmatpush.msra.mxu0 %v1826
        %1896 = vmatpush.msra.mxu0 %v1824
        %1897 = vmatpush.msra.mxu0 %v1822
        %1898 = vmatpush.msra.mxu0 %v1820
        %1899 = vmatpush.msra.mxu0 %v1818
        %1900 = vmatpush.msra.mxu0 %v1816
        %1901 = vmatpush.msra.mxu0 %v1814
        %1902 = vmatpush.msra.mxu0 %v1812
        %1903 = vmatpush.msra.mxu0 %v1810
        %1904 = vmatpush.msra.mxu0 %v1808
        %1905 = vmatpush.msra.mxu0 %v1806
        %1906 = vmatmul.f32.gmra.mxu0 %v1828
        %v1907 = vpop.f32.mrf.mxu0
        %v1908 = vadd.f32 %v1888, %v1907
        %1909 = vdwg.mxu0
        %v1910 = vld [vmem:[%s6] sm:$0xff]
        %1912 = vset.pattern.permute.xlu0 0
        %1913 = vperm.xlu0 %1912, %v1910
        %v1914 = vpop.permute.xlu0 %1913
        %v1916 = vmul.f32 %v1868, %v1914
        %v1917 = vmul.f32 %v1908, %v1914
        %v1918 = vld [vmem:[%s7] sm:$0xff]
        %1920 = vset.pattern.permute.xlu0 0
        %1921 = vperm.xlu0 %1920, %v1918
        %v1922 = vpop.permute.xlu0 %1921
        %v1924 = vadd.f32 %v1916, %v1922
        %v1925 = vadd.f32 %v1917, %v1922
        %v1926 = vadd.f32 %v1924, %v341
        %v1927 = vadd.f32 %v1925, %v342
        %v1928 = vmax.f32 %v1926, 0.0
        %v1929 = vmax.f32 %v1927, 0.0
        %1930 = vst [vmem:[%s340] sm:$0xff] %v1928
        %1931 = vst.msk [vmem:[%s340 + $0x8] sm:$0xff] %vm377, %v1929
        %s1932 = sand.u32 %s207, 1
        %s1933 = scalar_lea.sflag [#allocation6], %s1932
        %s1934 = sand.u32 %s207, 1
        %s1935 = smul.addr %s1934, 16
        %s1936 = scalar_lea.vmem [#allocation9], %s1935
        // Predicated region
        $region61: #{tpu_custom_call.1} parent=51 // pred_check
          %p1937 = pneg %p217
        $region62: #{tpu_custom_call.1} parent=51 // pred_check_branch
          %1939 = sbr.rel (%p1937) target = $region64
        $region63: #{tpu_custom_call.1} parent=51 // pred_region
          %1941 = vsyncadd %s1933, 0
          %s1942 = smul.addr %s26, 2
          %s1943 = smul.addr %s1942, 8
          %s1944 = scalar_lea.hbm %s8, %s1943
          %s1946 = sshll.u32 %s1936, 4
          %s1947 = int_to_ptr.vmem [resolvable:$true] %s1946
          %s1948 = sshll.u32 %s1944, 4
          %s1949 = int_to_ptr.hbm [resolvable:$true] %s1948
          %1951 = dma.vmem_to_hbm [thread:$0]  %s1947, 256, %s1949, %s1933
        $region64: #{tpu_custom_call.1} parent=51 // pred_fallthru
          _
      $region52: #{tpu_custom_call.1} parent=5 // pred_fallthru
        _
      %p1952 = scmp.le.s32.totalorder 2, %s21
      // Predicated region
      $region65: #{tpu_custom_call.1} parent=5 // pred_check
        %p1953 = pneg %p1952
      $region66: #{tpu_custom_call.1} parent=5 // pred_check_branch
        %1955 = sbr.rel (%p1953) target = $region68
      $region67: #{tpu_custom_call.1} parent=5 // pred_region
        %s1956 = ssub.s32 %s21, 2
        // Predicated region
        $region69: #{tpu_custom_call.1} parent=67 // pred_check
          %p1957 = pneg %p223
        $region70: #{tpu_custom_call.1} parent=67 // pred_check_branch
          %1959 = sbr.rel (%p1957) target = $region72
        $region71: #{tpu_custom_call.1} parent=67 // pred_region
          %s1960 = sand.u32 %s208, 1
          %s1961 = scalar_lea.sflag [#allocation6], %s1960
          %s1962 = sand.u32 %s208, 1
          %s1963 = smul.addr %s1962, 16
          %s1964 = scalar_lea.vmem [#allocation9], %s1963
          %1966 = dma.done %s1961, 256
        $region72: #{tpu_custom_call.1} parent=67 // pred_fallthru
          _
      $region68: #{tpu_custom_call.1} parent=5 // pred_fallthru
        _
    $region6: #{tpu_custom_call.1} parent=1 // loop_footer
      %s25 = sadd.s32 1, %s21
    $region7: #{tpu_custom_call.1} parent=1 // loop_footer_branch
      %20 = sbr.rel target = $region3
    $region8: #{tpu_custom_call.1} parent=1 // loop_exit
      _
    %1967 = vsyncpa [#allocation5], 1
    %s1968 = scalar_lea.sflag [#allocation5], 1
    %1969 = vsyncpa %s1968, 1
    %1970 = vsyncpa [#allocation8], 1
    %1971 = vsyncpa [#allocation6], 1
    %s1972 = scalar_lea.sflag [#allocation6], 1
    %1973 = vsyncpa %s1972, 1

</llo_original>
